<compile_context>
chip_gen: v5e
topology: v5e:2x2
jax: 0.10.0
libtpu: 0.0.40
codegen_flags: <defaults>
</compile_context>

<pallas_src>
import functools

import jax
import jax.numpy as jnp
from jax.experimental import pallas as pl
from jax.experimental.pallas import tpu as pltpu


def _round_up(n, m):
    return ((n + m - 1) // m) * m


def _gated_attn_kernel_c1(x_ref, wa_ref, ba_ref, wb_ref, bb_ref, wc_ref, bc_ref,
                          a_out_ref):
    """n_classes == 1 path: final projection as VPU mul + lane reduce."""
    x = x_ref[...]  # native dtype (f32 or bf16) straight into the MXU
    a = jnp.tanh(
        jnp.dot(x, wa_ref[...], preferred_element_type=jnp.float32) + ba_ref[...])
    b = jax.nn.sigmoid(
        jnp.dot(x, wb_ref[...], preferred_element_type=jnp.float32) + bb_ref[...])
    gated = a * b  # (tm, D) f32
    # wc_ref is a (1, D) row; reduce along lanes (XLU) instead of a skinny matmul.
    attn = jnp.sum(gated * wc_ref[...], axis=-1, keepdims=True) + bc_ref[0, 0]
    a_out_ref[...] = attn.astype(a_out_ref.dtype)


def _gated_attn_kernel(x_ref, wa_ref, ba_ref, wb_ref, bb_ref, wc_ref, bc_ref,
                       a_out_ref):
    """General n_classes path: final projection on the MXU."""
    x = x_ref[...]
    a = jnp.tanh(
        jnp.dot(x, wa_ref[...], preferred_element_type=jnp.float32) + ba_ref[...])
    b = jax.nn.sigmoid(
        jnp.dot(x, wb_ref[...], preferred_element_type=jnp.float32) + bb_ref[...])
    gated = a * b  # (tm, D) f32
    attn = jnp.dot(gated, wc_ref[...], preferred_element_type=jnp.float32) + bc_ref[...]
    a_out_ref[...] = attn.astype(a_out_ref.dtype)


def attn_net_gated(x, wa, ba, wb, bb, wc, bc, *, block_n=512):
    """x: (N, L); wa/wb: (L, D); ba/bb: (1, D); wc: (D, C); bc: (1, C).

    Returns (A, x) like the PyTorch module. `x` is returned as-is from the
    wrapper (no kernel copy).
    """
    N, L = x.shape
    D = wa.shape[1]
    C = wc.shape[1]

    # Row tiling: block_n a multiple of 8, clamped to the (padded) batch size.
    block_n = max(8, min(_round_up(block_n, 8), _round_up(N, 8)))
    n_pad = _round_up(N, block_n)
    x_p = x if n_pad == N else jnp.pad(x, ((0, n_pad - N), (0, 0)))

    grid = (n_pad // block_n,)
    row = lambda i: (i, 0)    # tile rows of x / A
    full = lambda i: (0, 0)   # weights/biases: same full block every step

    if C == 1:
        kernel = _gated_attn_kernel_c1
        wc_in = wc.T                                     # (1, D) row
        wc_spec = pl.BlockSpec((1, D), full)
        bc_spec = pl.BlockSpec(memory_space=pltpu.SMEM)  # scalar bias in SMEM
    else:
        kernel = _gated_attn_kernel
        wc_in = wc                                       # (D, C)
        wc_spec = pl.BlockSpec((D, C), full)
        bc_spec = pl.BlockSpec((1, C), full)

    x_bytes = jnp.dtype(x.dtype).itemsize
    w_bytes = jnp.dtype(wa.dtype).itemsize
    cost = pl.CostEstimate(
        flops=2 * n_pad * L * (2 * D) + 2 * n_pad * D * C,
        transcendentals=2 * n_pad * D,
        bytes_accessed=(n_pad * L * x_bytes                              # x
                        + (wa.size + wb.size + ba.size + bb.size) * w_bytes
                        + (wc.size + bc.size) * w_bytes                  # classifier
                        + n_pad * C * x_bytes),                          # A
    )

    A = pl.pallas_call(
        kernel,
        out_shape=jax.ShapeDtypeStruct((n_pad, C), x.dtype),
        grid_spec=pltpu.PrefetchScalarGridSpec(
            num_scalar_prefetch=0,
            grid=grid,
            in_specs=[
                pl.BlockSpec((block_n, L), row),   # x tile (streamed)
                pl.BlockSpec((L, D), full),        # Wa (resident)
                pl.BlockSpec((1, D), full),        # ba
                pl.BlockSpec((L, D), full),        # Wb (resident)
                pl.BlockSpec((1, D), full),        # bb
                wc_spec,                           # Wc (row or matrix)
                bc_spec,                           # bc (SMEM scalar or VMEM row)
            ],
            out_specs=pl.BlockSpec((block_n, C), row),
        ),
        compiler_params=pltpu.CompilerParams(
            dimension_semantics=("parallel",),
        ),
        cost_estimate=cost,
    )(x_p, wa, ba, wb, bb, wc_in, bc)

    if n_pad != N:
        A = A[:N]
    # Second output of the module is x itself: return it directly, zero copies.
    return A, x


def init_params(key, L, D, n_classes, dtype=jnp.float32):
    """Deterministic synthetic parameters (nn.Linear weights, pre-transposed)."""
    k = jax.random.split(key, 6)
    wa = jax.random.normal(k[0], (L, D), dtype) * 0.02
    ba = jax.random.normal(k[1], (1, D), dtype) * 0.02
    wb = jax.random.normal(k[2], (L, D), dtype) * 0.02
    bb = jax.random.normal(k[3], (1, D), dtype) * 0.02
    wc = jax.random.normal(k[4], (D, n_classes), dtype) * 0.02
    bc = jax.random.normal(k[5], (1, n_classes), dtype) * 0.02
    return wa, ba, wb, bb, wc, bc


def _reference(x, wa, ba, wb, bb, wc, bc):
    a = jnp.tanh(x @ wa + ba)
    b = jax.nn.sigmoid(x @ wb + bb)
    return (a * b) @ wc + bc


if __name__ == "__main__":
    # TODO(synk): nn.Dropout branch (dropout=True) not implemented — module
    # default is dropout=False and inference semantics are the identity.
    key = jax.random.PRNGKey(0)

    # Case 1: module defaults L=1024, D=256, n_classes=1; ragged N=37 with a
    # small tile (block_n=16) to exercise padding + multi-step pipelining.
    N, L, D, C = 37, 1024, 256, 1
    kx, kp, kx2, kp2 = jax.random.split(key, 4)
    x = jax.random.normal(kx, (N, L), jnp.float32)
    wa, ba, wb, bb, wc, bc = init_params(kp, L, D, C)

    A, x_out = attn_net_gated(x, wa, ba, wb, bb, wc, bc, block_n=16)
    jax.block_until_ready((A, x_out))

    A_ref = _reference(x, wa, ba, wb, bb, wc, bc)
    assert A.shape == (N, C)
    assert x_out.shape == (N, L)
    assert jnp.allclose(A, A_ref, atol=1e-4, rtol=1e-4)
    assert jnp.allclose(x_out, x, atol=0, rtol=0)

    # Case 2: multi-class head (general MXU path for the final projection).
    N2, C2 = 24, 3
    x2 = jax.random.normal(kx2, (N2, L), jnp.float32)
    wa2, ba2, wb2, bb2, wc2, bc2 = init_params(kp2, L, D, C2)

    A2, x2_out = attn_net_gated(x2, wa2, ba2, wb2, bb2, wc2, bc2, block_n=8)
    jax.block_until_ready((A2, x2_out))

    A2_ref = _reference(x2, wa2, ba2, wb2, bb2, wc2, bc2)
    assert A2.shape == (N2, C2)
    assert jnp.allclose(A2, A2_ref, atol=1e-4, rtol=1e-4)
    assert jnp.allclose(x2_out, x2, atol=0, rtol=0)

    print("KERNEL_OK")
</pallas_src>

<mosaic_0001>
module attributes {stable_mosaic.version = 11 : i64} {
  func.func @_gated_attn_kernel_c1(%arg0: i32, %arg1: memref<16x1024xf32, #tpu.memory_space<vmem>>, %arg2: memref<1024x256xf32, #tpu.memory_space<vmem>>, %arg3: memref<1x256xf32, #tpu.memory_space<vmem>>, %arg4: memref<1024x256xf32, #tpu.memory_space<vmem>>, %arg5: memref<1x256xf32, #tpu.memory_space<vmem>>, %arg6: memref<1x256xf32, #tpu.memory_space<vmem>>, %arg7: memref<1x1xf32, #tpu.memory_space<smem>>, %arg8: memref<16x1xf32, #tpu.memory_space<vmem>>) attributes {dimension_semantics = [#tpu.dimension_semantics<parallel>], iteration_bounds = array<i64: 3>, scalar_prefetch = 0 : i64, scratch_operands = 0 : i64, tpu.core_type = #tpu.core_type<tc>, window_params = [{transform_indices = @transform_0, window_bounds = array<i64: 16, 1024>}, {pipeline_mode = #tpu.pipeline_mode<synchronous>, transform_indices = @transform_1, window_bounds = array<i64: 1024, 256>}, {pipeline_mode = #tpu.pipeline_mode<synchronous>, transform_indices = @transform_2, window_bounds = array<i64: 1, 256>}, {pipeline_mode = #tpu.pipeline_mode<synchronous>, transform_indices = @transform_3, window_bounds = array<i64: 1024, 256>}, {pipeline_mode = #tpu.pipeline_mode<synchronous>, transform_indices = @transform_4, window_bounds = array<i64: 1, 256>}, {pipeline_mode = #tpu.pipeline_mode<synchronous>, transform_indices = @transform_5, window_bounds = array<i64: 1, 256>}, {transform_indices = @transform_6, window_bounds = array<i64: 1, 1>}, {transform_indices = @transform_7, window_bounds = array<i64: 16, 1>}]} {
    %c0 = arith.constant 0 : index
    %c0_0 = arith.constant 0 : index
    %0 = vector.load %arg1[%c0, %c0_0] : memref<16x1024xf32, #tpu.memory_space<vmem>>, vector<16x1024xf32>
    %c0_1 = arith.constant 0 : index
    %c0_2 = arith.constant 0 : index
    %1 = vector.load %arg2[%c0_1, %c0_2] : memref<1024x256xf32, #tpu.memory_space<vmem>>, vector<1024x256xf32>
    %cst = arith.constant dense<0.000000e+00> : vector<16x256xf32>
    %2 = tpu.matmul %0, %1, %cst {dimension_numbers = #tpu.dot_dimension_numbers<[1], [0], [0], [1], [0, 0, 1, 1], [], []>} : vector<16x1024xf32>, vector<1024x256xf32>, vector<16x256xf32> -> vector<16x256xf32>
    %c0_3 = arith.constant 0 : index
    %c0_4 = arith.constant 0 : index
    %3 = vector.load %arg3[%c0_3, %c0_4] : memref<1x256xf32, #tpu.memory_space<vmem>>, vector<1x256xf32>
    %4 = vector.broadcast %3 : vector<1x256xf32> to vector<16x256xf32>
    %5 = arith.addf %2, %4 : vector<16x256xf32>
    %6 = math.tanh %5 : vector<16x256xf32>
    %c0_5 = arith.constant 0 : index
    %c0_6 = arith.constant 0 : index
    %7 = vector.load %arg4[%c0_5, %c0_6] : memref<1024x256xf32, #tpu.memory_space<vmem>>, vector<1024x256xf32>
    %cst_7 = arith.constant dense<0.000000e+00> : vector<16x256xf32>
    %8 = tpu.matmul %0, %7, %cst_7 {dimension_numbers = #tpu.dot_dimension_numbers<[1], [0], [0], [1], [0, 0, 1, 1], [], []>} : vector<16x1024xf32>, vector<1024x256xf32>, vector<16x256xf32> -> vector<16x256xf32>
    %c0_8 = arith.constant 0 : index
    %c0_9 = arith.constant 0 : index
    %9 = vector.load %arg5[%c0_8, %c0_9] : memref<1x256xf32, #tpu.memory_space<vmem>>, vector<1x256xf32>
    %10 = vector.broadcast %9 : vector<1x256xf32> to vector<16x256xf32>
    %11 = arith.addf %8, %10 : vector<16x256xf32>
    %12 = arith.negf %11 : vector<16x256xf32>
    %13 = math.exp %12 : vector<16x256xf32>
    %cst_10 = arith.constant 1.000000e+00 : f32
    %14 = vector.broadcast %cst_10 : f32 to vector<16x256xf32>
    %15 = arith.addf %14, %13 : vector<16x256xf32>
    %16 = arith.divf %14, %15 : vector<16x256xf32>
    %17 = arith.mulf %6, %16 : vector<16x256xf32>
    %c0_11 = arith.constant 0 : index
    %c0_12 = arith.constant 0 : index
    %18 = vector.load %arg6[%c0_11, %c0_12] : memref<1x256xf32, #tpu.memory_space<vmem>>, vector<1x256xf32>
    %19 = vector.broadcast %18 : vector<1x256xf32> to vector<16x256xf32>
    %20 = arith.mulf %17, %19 : vector<16x256xf32>
    %cst_13 = arith.constant dense<0.000000e+00> : vector<16xf32>
    %21 = vector.multi_reduction <add>, %20, %cst_13 [1] : vector<16x256xf32> to vector<16xf32>
    %22 = vector.shape_cast %21 : vector<16xf32> to vector<16x1xf32>
    %c0_14 = arith.constant 0 : index
    %c0_15 = arith.constant 0 : index
    %23 = memref.load %arg7[%c0_14, %c0_15] : memref<1x1xf32, #tpu.memory_space<smem>>
    %24 = vector.broadcast %23 : f32 to vector<16x1xf32>
    %25 = arith.addf %22, %24 : vector<16x1xf32>
    %c0_16 = arith.constant 0 : index
    %c0_17 = arith.constant 0 : index
    %26 = vector.load %arg8[%c0_16, %c0_17] : memref<16x1xf32, #tpu.memory_space<vmem>>, vector<16x1xf32>
    tpu.vector_store %arg8[%c0_16, %c0_17], %25 {strides = array<i32>} : memref<16x1xf32, #tpu.memory_space<vmem>>, vector<16x1xf32>,
    return
  }
  func.func @transform_0(%arg0: i32) -> (i32, i32) {
    %c0_i32 = arith.constant 0 : i32
    %c0_i32_0 = arith.constant 0 : i32
    return %arg0, %c0_i32 : i32, i32
  }
  func.func @transform_1(%arg0: i32) -> (i32, i32) {
    %c0_i32 = arith.constant 0 : i32
    %c0_i32_0 = arith.constant 0 : i32
    %c0_i32_1 = arith.constant 0 : i32
    return %c0_i32, %c0_i32_0 : i32, i32
  }
  func.func @transform_2(%arg0: i32) -> (i32, i32) {
    %c0_i32 = arith.constant 0 : i32
    %c0_i32_0 = arith.constant 0 : i32
    %c0_i32_1 = arith.constant 0 : i32
    return %c0_i32, %c0_i32_0 : i32, i32
  }
  func.func @transform_3(%arg0: i32) -> (i32, i32) {
    %c0_i32 = arith.constant 0 : i32
    %c0_i32_0 = arith.constant 0 : i32
    %c0_i32_1 = arith.constant 0 : i32
    return %c0_i32, %c0_i32_0 : i32, i32
  }
  func.func @transform_4(%arg0: i32) -> (i32, i32) {
    %c0_i32 = arith.constant 0 : i32
    %c0_i32_0 = arith.constant 0 : i32
    %c0_i32_1 = arith.constant 0 : i32
    return %c0_i32, %c0_i32_0 : i32, i32
  }
  func.func @transform_5(%arg0: i32) -> (i32, i32) {
    %c0_i32 = arith.constant 0 : i32
    %c0_i32_0 = arith.constant 0 : i32
    %c0_i32_1 = arith.constant 0 : i32
    return %c0_i32, %c0_i32_0 : i32, i32
  }
  func.func @transform_6(%arg0: i32) -> (i32, i32) {
    %c0_i32 = arith.constant 0 : i32
    %c0_i32_0 = arith.constant 0 : i32
    %c0_i32_1 = arith.constant 0 : i32
    return %c0_i32, %c0_i32_0 : i32, i32
  }
  func.func @transform_7(%arg0: i32) -> (i32, i32) {
    %c0_i32 = arith.constant 0 : i32
    %c0_i32_0 = arith.constant 0 : i32
    return %arg0, %c0_i32 : i32, i32
  }
}

</mosaic_0001>

<llo_original>
// kernel: tpu_custom_call.1
$region0: #{tpu_custom_call.1}
  #allocation0 [shape = 'u32[]', space=smem, size = 0x4, offset = 0x4, fixed_abs, tag = 'smem constant byte address 0x4 - core index']
  #allocation1 [shape = 'u32[72,128]{1,0:T(1,128)}', space=vmem, size = 0x9000, scoped, tag = 'internal scratch']
  #allocation2 [shape = 'f32[1,1]{1,0:T(1,128)S(6)}', space=smem, size = 0x200, scoped, tag = 'scoped memory for tpu_custom_call.1']
  %s0 = inlined_call_operand.hbm [shape: f32[48,1024], index: 0, kind: input, shape index: {}]
  %s1 = inlined_call_operand.hbm [shape: f32[1024,256], index: 1, kind: input, shape index: {}]
  %s2 = inlined_call_operand.vmem [shape: f32[1,256], index: 2, kind: input, shape index: {}]
  %s3 = inlined_call_operand.hbm [shape: f32[1024,256], index: 3, kind: input, shape index: {}]
  %s4 = inlined_call_operand.vmem [shape: f32[1,256], index: 4, kind: input, shape index: {}]
  %s5 = inlined_call_operand.vmem [shape: f32[1,256], index: 5, kind: input, shape index: {}]
  %s6 = inlined_call_operand.<no memory space> [shape: f32[1,1], index: 6, kind: input, shape index: {}]
  %s7 = inlined_call_operand.vmem [shape: f32[48,1], index: 7, kind: output, shape index: {}]
  %s8 = sld [smem:[#allocation0]]
  $region73: #{tpu_custom_call.1} parent=0
    _
  %s10 = ssub.s32 1, %s8
  %s11 = scalar_select 0, %s10, %s8
  %12 = sst [smem:[#allocation2]] %s6
  $region1: #{tpu_custom_call.1} parent=0
    #allocation3 [shape = 'u8[131072]{0}', space=vmem, size = 0x20000, scoped, tag = 'input window, operand 0']
    #allocation4 [shape = 's32[2]{0}', space=sflag, size = 0x8, scoped, tag = 'scoped memory for tpu_custom_call.1']
    #allocation5 [shape = 'u8[1048576]{0}', space=vmem, size = 0x100000, scoped, tag = 'input window, operand 1, single buffered']
    #allocation6 [shape = 's32[1]{0}', space=sflag, size = 0x4, scoped, tag = 'scoped memory for tpu_custom_call.1']
    #allocation7 [shape = 'u8[1048576]{0}', space=vmem, size = 0x100000, scoped, tag = 'input window, operand 3, single buffered']
    %13 = vsyncpa [#allocation4], 0
    %s14 = scalar_lea.sflag [#allocation4], 1
    %15 = vsyncpa %s14, 0
    %16 = vsyncpa [#allocation6], 0
    loop: start=0, step=1, limit=5
    $region2: #{tpu_custom_call.1} parent=1 // loop_pre_header
      _
    $region3: #{tpu_custom_call.1} parent=1 // loop_header
      %s18 = sphi 0, %s22
      %p19 = scmp.ge.s32.totalorder %s18, 5
      %s28 = sphi 0, %s30
      %s31 = sphi 0, %s28
      %s32 = sphi 0, %s31
      %s48 = sphi 0, %s32
      %s52 = sphi 0, %s52
      %s54 = sphi 0, %s52
      %s55 = sphi 0, %s54
      %s69 = sphi 0, %s55
      %s73 = sphi 0, %s73
      %s75 = sphi 0, %s73
      %s76 = sphi 0, %s75
      %s90 = sphi 0, %s76
      %s94 = sphi 0, %s94
      %s96 = sphi 0, %s94
      %s97 = sphi 0, %s96
      %s111 = sphi 0, %s97
      %s115 = sphi 0, %s115
      %s117 = sphi 0, %s115
      %s118 = sphi 0, %s117
      %s132 = sphi 0, %s118
      %s136 = sphi 0, %s136
      %s138 = sphi 0, %s136
      %s139 = sphi 0, %s138
      %s153 = sphi 0, %s139
      %s157 = sphi 0, %s157
      %s159 = sphi 0, %s157
      %s160 = sphi 0, %s159
      %s174 = sphi 0, %s160
      %s180 = sphi 0, %s182
      %s183 = sphi 0, %s180
      %s184 = sphi 0, %s183
      %s200 = sphi 0, %s184
    $region4: #{tpu_custom_call.1} parent=1 // loop_header_branch
      %21 = sbr.rel (%p19) target = $region8
    $region5: #{tpu_custom_call.1} parent=1 // loop_body
      %s23 = ssub.s32 %s18, 1
      %s24 = ssub.s32 %s18, 2
      %s25 = sadd.s32 %s18, 1
      %s26 = ssub.s32 %s18, %s25
      %p27 = scmp.eq.s32.totalorder %s26, 0
      %s29 = sadd.s32 %s28, 1
      %s30 = scalar_select %p27, %s28, %s29
      %p33 = pneg %p27
      %p34 = scmp.eq.s32.totalorder %s18, 2
      %p35 = por %p33, %p34
      %p36 = scmp.ne.s32.totalorder %s28, %s31
      %p37 = scmp.eq.s32.totalorder %s18, 0
      %p38 = por %p36, %p37
      %p39 = scmp.ne.s32.totalorder %s28, %s31
      %p40 = scmp.eq.s32.totalorder %s23, 2
      %p41 = por %p39, %p40
      %p42 = scmp.ne.s32.totalorder %s31, %s32
      %p43 = scmp.eq.s32.totalorder %s23, 0
      %p44 = por %p42, %p43
      %p45 = scmp.ne.s32.totalorder %s31, %s32
      %p46 = scmp.eq.s32.totalorder %s24, 2
      %p47 = por %p45, %p46
      %p49 = scmp.ne.s32.totalorder %s32, %s48
      %p50 = scmp.eq.s32.totalorder %s24, 0
      %p51 = por %p49, %p50
      %s53 = sadd.s32 %s52, 1
      %p56 = scmp.eq.s32.totalorder %s18, 2
      %p57 = scmp.ne.s32.totalorder %s52, %s54
      %p58 = scmp.eq.s32.totalorder %s18, 0
      %p59 = por %p57, %p58
      %p60 = scmp.ne.s32.totalorder %s52, %s54
      %p61 = scmp.eq.s32.totalorder %s23, 2
      %p62 = por %p60, %p61
      %p63 = scmp.ne.s32.totalorder %s54, %s55
      %p64 = scmp.eq.s32.totalorder %s23, 0
      %p65 = por %p63, %p64
      %p66 = scmp.ne.s32.totalorder %s54, %s55
      %p67 = scmp.eq.s32.totalorder %s24, 2
      %p68 = por %p66, %p67
      %p70 = scmp.ne.s32.totalorder %s55, %s69
      %p71 = scmp.eq.s32.totalorder %s24, 0
      %p72 = por %p70, %p71
      %s74 = sadd.s32 %s73, 1
      %p77 = scmp.eq.s32.totalorder %s18, 2
      %p78 = scmp.ne.s32.totalorder %s73, %s75
      %p79 = scmp.eq.s32.totalorder %s18, 0
      %p80 = por %p78, %p79
      %p81 = scmp.ne.s32.totalorder %s73, %s75
      %p82 = scmp.eq.s32.totalorder %s23, 2
      %p83 = por %p81, %p82
      %p84 = scmp.ne.s32.totalorder %s75, %s76
      %p85 = scmp.eq.s32.totalorder %s23, 0
      %p86 = por %p84, %p85
      %p87 = scmp.ne.s32.totalorder %s75, %s76
      %p88 = scmp.eq.s32.totalorder %s24, 2
      %p89 = por %p87, %p88
      %p91 = scmp.ne.s32.totalorder %s76, %s90
      %p92 = scmp.eq.s32.totalorder %s24, 0
      %p93 = por %p91, %p92
      %s95 = sadd.s32 %s94, 1
      %p98 = scmp.eq.s32.totalorder %s18, 2
      %p99 = scmp.ne.s32.totalorder %s94, %s96
      %p100 = scmp.eq.s32.totalorder %s18, 0
      %p101 = por %p99, %p100
      %p102 = scmp.ne.s32.totalorder %s94, %s96
      %p103 = scmp.eq.s32.totalorder %s23, 2
      %p104 = por %p102, %p103
      %p105 = scmp.ne.s32.totalorder %s96, %s97
      %p106 = scmp.eq.s32.totalorder %s23, 0
      %p107 = por %p105, %p106
      %p108 = scmp.ne.s32.totalorder %s96, %s97
      %p109 = scmp.eq.s32.totalorder %s24, 2
      %p110 = por %p108, %p109
      %p112 = scmp.ne.s32.totalorder %s97, %s111
      %p113 = scmp.eq.s32.totalorder %s24, 0
      %p114 = por %p112, %p113
      %s116 = sadd.s32 %s115, 1
      %p119 = scmp.eq.s32.totalorder %s18, 2
      %p120 = scmp.ne.s32.totalorder %s115, %s117
      %p121 = scmp.eq.s32.totalorder %s18, 0
      %p122 = por %p120, %p121
      %p123 = scmp.ne.s32.totalorder %s115, %s117
      %p124 = scmp.eq.s32.totalorder %s23, 2
      %p125 = por %p123, %p124
      %p126 = scmp.ne.s32.totalorder %s117, %s118
      %p127 = scmp.eq.s32.totalorder %s23, 0
      %p128 = por %p126, %p127
      %p129 = scmp.ne.s32.totalorder %s117, %s118
      %p130 = scmp.eq.s32.totalorder %s24, 2
      %p131 = por %p129, %p130
      %p133 = scmp.ne.s32.totalorder %s118, %s132
      %p134 = scmp.eq.s32.totalorder %s24, 0
      %p135 = por %p133, %p134
      %s137 = sadd.s32 %s136, 1
      %p140 = scmp.eq.s32.totalorder %s18, 2
      %p141 = scmp.ne.s32.totalorder %s136, %s138
      %p142 = scmp.eq.s32.totalorder %s18, 0
      %p143 = por %p141, %p142
      %p144 = scmp.ne.s32.totalorder %s136, %s138
      %p145 = scmp.eq.s32.totalorder %s23, 2
      %p146 = por %p144, %p145
      %p147 = scmp.ne.s32.totalorder %s138, %s139
      %p148 = scmp.eq.s32.totalorder %s23, 0
      %p149 = por %p147, %p148
      %p150 = scmp.ne.s32.totalorder %s138, %s139
      %p151 = scmp.eq.s32.totalorder %s24, 2
      %p152 = por %p150, %p151
      %p154 = scmp.ne.s32.totalorder %s139, %s153
      %p155 = scmp.eq.s32.totalorder %s24, 0
      %p156 = por %p154, %p155
      %s158 = sadd.s32 %s157, 1
      %p161 = scmp.eq.s32.totalorder %s18, 2
      %p162 = scmp.ne.s32.totalorder %s157, %s159
      %p163 = scmp.eq.s32.totalorder %s18, 0
      %p164 = por %p162, %p163
      %p165 = scmp.ne.s32.totalorder %s157, %s159
      %p166 = scmp.eq.s32.totalorder %s23, 2
      %p167 = por %p165, %p166
      %p168 = scmp.ne.s32.totalorder %s159, %s160
      %p169 = scmp.eq.s32.totalorder %s23, 0
      %p170 = por %p168, %p169
      %p171 = scmp.ne.s32.totalorder %s159, %s160
      %p172 = scmp.eq.s32.totalorder %s24, 2
      %p173 = por %p171, %p172
      %p175 = scmp.ne.s32.totalorder %s160, %s174
      %p176 = scmp.eq.s32.totalorder %s24, 0
      %p177 = por %p175, %p176
      %s178 = ssub.s32 %s18, %s25
      %p179 = scmp.eq.s32.totalorder %s178, 0
      %s181 = sadd.s32 %s180, 1
      %s182 = scalar_select %p179, %s180, %s181
      %p185 = pneg %p179
      %p186 = scmp.eq.s32.totalorder %s18, 2
      %p187 = por %p185, %p186
      %p188 = scmp.ne.s32.totalorder %s180, %s183
      %p189 = scmp.eq.s32.totalorder %s18, 0
      %p190 = por %p188, %p189
      %p191 = scmp.ne.s32.totalorder %s180, %s183
      %p192 = scmp.eq.s32.totalorder %s23, 2
      %p193 = por %p191, %p192
      %p194 = scmp.ne.s32.totalorder %s183, %s184
      %p195 = scmp.eq.s32.totalorder %s23, 0
      %p196 = por %p194, %p195
      %p197 = scmp.ne.s32.totalorder %s183, %s184
      %p198 = scmp.eq.s32.totalorder %s24, 2
      %p199 = por %p197, %p198
      %p201 = scmp.ne.s32.totalorder %s184, %s200
      %p202 = scmp.eq.s32.totalorder %s24, 0
      %p203 = por %p201, %p202
      %p204 = scmp.le.s32.totalorder 1, %s18
      %p205 = scmp.lt.s32.totalorder %s18, 4
      %p206 = pnand %p204, %p205
      %p207 = pneg %p206
      // Predicated region
      $region9: #{tpu_custom_call.1} parent=5 // pred_check
        _
      $region10: #{tpu_custom_call.1} parent=5 // pred_check_branch
        %209 = sbr.rel (%p206) target = $region12
      $region11: #{tpu_custom_call.1} parent=5 // pred_region
        %s210 = ssub.s32 %s18, 1
        // Predicated region
        $region13: #{tpu_custom_call.1} parent=11 // pred_check
          %p211 = pneg %p65
        $region14: #{tpu_custom_call.1} parent=11 // pred_check_branch
          %213 = sbr.rel (%p211) target = $region16
        $region15: #{tpu_custom_call.1} parent=11 // pred_region
          %215 = vsyncadd [#allocation6], 0
          %s216 = sshll.u32 %s1, 4
          %s217 = int_to_ptr.hbm [resolvable:$true] %s216
          %s218 = sshll.u32 [#allocation5], 4
          %s219 = int_to_ptr.vmem [resolvable:$true] %s218
          %224 = dma.hbm_to_vmem [thread:$0]  %s217, 32768, %s219, [#allocation6], 256, 256, 16
        $region16: #{tpu_custom_call.1} parent=11 // pred_fallthru
          _
        // Predicated region
        $region17: #{tpu_custom_call.1} parent=11 // pred_check
          %p225 = pneg %p86
        $region18: #{tpu_custom_call.1} parent=11 // pred_check_branch
          %227 = sbr.rel (%p225) target = $region20
        $region19: #{tpu_custom_call.1} parent=11 // pred_region
          _
        $region20: #{tpu_custom_call.1} parent=11 // pred_fallthru
          _
        // Predicated region
        $region21: #{tpu_custom_call.1} parent=11 // pred_check
          %p228 = pneg %p107
        $region22: #{tpu_custom_call.1} parent=11 // pred_check_branch
          %230 = sbr.rel (%p228) target = $region24
        $region23: #{tpu_custom_call.1} parent=11 // pred_region
          %232 = vsyncadd [#allocation6], 0
          %s233 = sshll.u32 %s3, 4
          %s234 = int_to_ptr.hbm [resolvable:$true] %s233
          %s235 = sshll.u32 [#allocation7], 4
          %s236 = int_to_ptr.vmem [resolvable:$true] %s235
          %241 = dma.hbm_to_vmem [thread:$0]  %s234, 32768, %s236, [#allocation6], 256, 256, 16
        $region24: #{tpu_custom_call.1} parent=11 // pred_fallthru
          _
        // Predicated region
        $region25: #{tpu_custom_call.1} parent=11 // pred_check
          %p242 = pneg %p128
        $region26: #{tpu_custom_call.1} parent=11 // pred_check_branch
          %244 = sbr.rel (%p242) target = $region28
        $region27: #{tpu_custom_call.1} parent=11 // pred_region
          _
        $region28: #{tpu_custom_call.1} parent=11 // pred_fallthru
          _
        // Predicated region
        $region29: #{tpu_custom_call.1} parent=11 // pred_check
          %p245 = pneg %p149
        $region30: #{tpu_custom_call.1} parent=11 // pred_check_branch
          %247 = sbr.rel (%p245) target = $region32
        $region31: #{tpu_custom_call.1} parent=11 // pred_region
          _
        $region32: #{tpu_custom_call.1} parent=11 // pred_fallthru
          _
        // Predicated region
        $region33: #{tpu_custom_call.1} parent=11 // pred_check
          %p248 = pneg %p170
        $region34: #{tpu_custom_call.1} parent=11 // pred_check_branch
          %250 = sbr.rel (%p248) target = $region36
        $region35: #{tpu_custom_call.1} parent=11 // pred_region
          _
        $region36: #{tpu_custom_call.1} parent=11 // pred_fallthru
          _
      $region12: #{tpu_custom_call.1} parent=5 // pred_fallthru
        _
      %p251 = scmp.lt.s32.totalorder %s18, 3
      // Predicated region
      $region37: #{tpu_custom_call.1} parent=5 // pred_check
        %p252 = pneg %p251
      $region38: #{tpu_custom_call.1} parent=5 // pred_check_branch
        %254 = sbr.rel (%p252) target = $region40
      $region39: #{tpu_custom_call.1} parent=5 // pred_region
        // Predicated region
        $region41: #{tpu_custom_call.1} parent=39 // pred_check
          %p255 = pneg %p38
        $region42: #{tpu_custom_call.1} parent=39 // pred_check_branch
          %257 = sbr.rel (%p255) target = $region44
        $region43: #{tpu_custom_call.1} parent=39 // pred_region
          %s258 = sand.u32 %s28, 1
          %s259 = scalar_lea.sflag [#allocation4], %s258
          %s260 = sand.u32 %s28, 1
          %s261 = smul.addr %s260, 128
          %s262 = scalar_lea.vmem [#allocation3], %s261
          %s263 = smul.u32 2, %s18
          %265 = vsyncadd %s259, 0
          %s266 = smul.addr %s263, 8
          %s267 = smul.addr %s266, 8
          %s268 = scalar_lea.hbm %s0, %s267
          %s269 = sshll.u32 %s268, 4
          %s270 = int_to_ptr.hbm [resolvable:$true] %s269
          %s271 = sshll.u32 %s262, 4
          %s272 = int_to_ptr.vmem [resolvable:$true] %s271
          %277 = dma.hbm_to_vmem [thread:$0]  %s270, 2048, %s272, %s259, 1024, 1024, 64
        $region44: #{tpu_custom_call.1} parent=39 // pred_fallthru
          _
      $region40: #{tpu_custom_call.1} parent=5 // pred_fallthru
        _
      %p278 = scmp.le.s32.totalorder 1, %s18
      %p279 = scmp.lt.s32.totalorder %s18, 4
      %p280 = pnand %p278, %p279
      %p281 = pneg %p280
      // Predicated region
      $region45: #{tpu_custom_call.1} parent=5 // pred_check
        _
      $region46: #{tpu_custom_call.1} parent=5 // pred_check_branch
        %283 = sbr.rel (%p280) target = $region48
      $region47: #{tpu_custom_call.1} parent=5 // pred_region
        %s284 = ssub.s32 %s18, 1
        %s285 = sand.u32 %s31, 1
        %s286 = scalar_lea.sflag [#allocation4], %s285
        %s287 = sand.u32 %s31, 1
        %s288 = smul.addr %s287, 128
        %s289 = scalar_lea.vmem [#allocation3], %s288
        // Predicated region
        $region49: #{tpu_custom_call.1} parent=47 // pred_check
          %p290 = pneg %p44
        $region50: #{tpu_custom_call.1} parent=47 // pred_check_branch
          %292 = sbr.rel (%p290) target = $region52
        $region51: #{tpu_custom_call.1} parent=47 // pred_region
          %294 = dma.done %s286, 2048
        $region52: #{tpu_custom_call.1} parent=47 // pred_fallthru
          _
        // Predicated region
        $region53: #{tpu_custom_call.1} parent=47 // pred_check
          %p295 = pneg %p65
        $region54: #{tpu_custom_call.1} parent=47 // pred_check_branch
          %297 = sbr.rel (%p295) target = $region56
        $region55: #{tpu_custom_call.1} parent=47 // pred_region
          %299 = dma.done [#allocation6], 32768
        $region56: #{tpu_custom_call.1} parent=47 // pred_fallthru
          _
        // Predicated region
        $region57: #{tpu_custom_call.1} parent=47 // pred_check
          %p300 = pneg %p107
        $region58: #{tpu_custom_call.1} parent=47 // pred_check_branch
          %302 = sbr.rel (%p300) target = $region60
        $region59: #{tpu_custom_call.1} parent=47 // pred_region
          %304 = dma.done [#allocation6], 32768
        $region60: #{tpu_custom_call.1} parent=47 // pred_fallthru
          _
        %s305 = sand.u32 %s31, 1
        %s306 = scalar_lea.sflag [#allocation4], %s305
        %s307 = sand.u32 %s31, 1
        %s308 = smul.addr %s307, 128
        %s309 = scalar_lea.vmem [#allocation3], %s308
        %p310 = pneg %p44
        %p311 = pneg %p41
        %p312 = pneg %p65
        %p313 = pneg %p62
        %p314 = pneg %p86
        %p315 = pneg %p83
        %p316 = pneg %p107
        %p317 = pneg %p104
        %p318 = pneg %p128
        %p319 = pneg %p125
        %p320 = pneg %p149
        %p321 = pneg %p146
        %p322 = pneg %p170
        %p323 = pneg %p167
        %p324 = pneg %p196
        %p325 = pneg %p193
        %s326 = smul.u32 2, %s23
        %p327 = scmp.lt.s32.totalorder %s326, 5
        %s328 = scalar_select %p327, %s326, 5
        %s329 = smul.addr %s328, 8
        %s330 = scalar_lea.vmem %s7, %s329
        %s331 = smul.u32 2, %s23
        %s332 = smul.u32 2, %s23
        %p333 = scmp.lt.s32.totalorder %s332, 5
        %s334 = scalar_select %p333, %s332, 5
        %s335 = smul.addr %s334, 8
        %s336 = scalar_lea.vmem %s7, %s335
        %s337 = smul.u32 2, %s23
        %v338 = vld [vmem:[%s289] sm:$0xff]
        %v339 = vld [vmem:[%s289 + $0x8] sm:$0xff]
        %v340 = vld [vmem:[%s289 + $0x10] sm:$0xff]
        %v341 = vld [vmem:[%s289 + $0x18] sm:$0xff]
        %v342 = vld [vmem:[%s289 + $0x20] sm:$0xff]
        %v343 = vld [vmem:[%s289 + $0x28] sm:$0xff]
        %v344 = vld [vmem:[%s289 + $0x30] sm:$0xff]
        %v345 = vld [vmem:[%s289 + $0x38] sm:$0xff]
        %v346 = vld [vmem:[%s289 + $0x40] sm:$0xff]
        %v347 = vld [vmem:[%s289 + $0x48] sm:$0xff]
        %v348 = vld [vmem:[%s289 + $0x50] sm:$0xff]
        %v349 = vld [vmem:[%s289 + $0x58] sm:$0xff]
        %v350 = vld [vmem:[%s289 + $0x60] sm:$0xff]
        %v351 = vld [vmem:[%s289 + $0x68] sm:$0xff]
        %v352 = vld [vmem:[%s289 + $0x70] sm:$0xff]
        %v353 = vld [vmem:[%s289 + $0x78] sm:$0xff]
        %v354 = vld [vmem:[#allocation5] sm:$0xff]
        %v355 = vld [vmem:[#allocation5 + $0x8] sm:$0xff]
        %v356 = vld [vmem:[#allocation5 + $0x10] sm:$0xff]
        %v357 = vld [vmem:[#allocation5 + $0x18] sm:$0xff]
        %v358 = vld [vmem:[#allocation5 + $0x20] sm:$0xff]
        %v359 = vld [vmem:[#allocation5 + $0x28] sm:$0xff]
        %v360 = vld [vmem:[#allocation5 + $0x30] sm:$0xff]
        %v361 = vld [vmem:[#allocation5 + $0x38] sm:$0xff]
        %v362 = vld [vmem:[#allocation5 + $0x40] sm:$0xff]
        %v363 = vld [vmem:[#allocation5 + $0x48] sm:$0xff]
        %v364 = vld [vmem:[#allocation5 + $0x50] sm:$0xff]
        %v365 = vld [vmem:[#allocation5 + $0x58] sm:$0xff]
        %v366 = vld [vmem:[#allocation5 + $0x60] sm:$0xff]
        %v367 = vld [vmem:[#allocation5 + $0x68] sm:$0xff]
        %v368 = vld [vmem:[#allocation5 + $0x70] sm:$0xff]
        %v369 = vld [vmem:[#allocation5 + $0x78] sm:$0xff]
        %v370 = vld [vmem:[#allocation5 + $0x80] sm:$0xff]
        %v371 = vld [vmem:[#allocation5 + $0x88] sm:$0xff]
        %v372 = vld [vmem:[#allocation5 + $0x90] sm:$0xff]
        %v373 = vld [vmem:[#allocation5 + $0x98] sm:$0xff]
        %v374 = vld [vmem:[#allocation5 + $0xa0] sm:$0xff]
        %v375 = vld [vmem:[#allocation5 + $0xa8] sm:$0xff]
        %v376 = vld [vmem:[#allocation5 + $0xb0] sm:$0xff]
        %v377 = vld [vmem:[#allocation5 + $0xb8] sm:$0xff]
        %v378 = vld [vmem:[#allocation5 + $0xc0] sm:$0xff]
        %v379 = vld [vmem:[#allocation5 + $0xc8] sm:$0xff]
        %v380 = vld [vmem:[#allocation5 + $0xd0] sm:$0xff]
        %v381 = vld [vmem:[#allocation5 + $0xd8] sm:$0xff]
        %v382 = vld [vmem:[#allocation5 + $0xe0] sm:$0xff]
        %v383 = vld [vmem:[#allocation5 + $0xe8] sm:$0xff]
        %v384 = vld [vmem:[#allocation5 + $0xf0] sm:$0xff]
        %v385 = vld [vmem:[#allocation5 + $0xf8] sm:$0xff]
        %v386 = vld [vmem:[#allocation5 + $0x100] sm:$0xff]
        %v387 = vld [vmem:[#allocation5 + $0x108] sm:$0xff]
        %v388 = vld [vmem:[#allocation5 + $0x110] sm:$0xff]
        %v389 = vld [vmem:[#allocation5 + $0x118] sm:$0xff]
        %v390 = vld [vmem:[#allocation5 + $0x120] sm:$0xff]
        %v391 = vld [vmem:[#allocation5 + $0x128] sm:$0xff]
        %v392 = vld [vmem:[#allocation5 + $0x130] sm:$0xff]
        %v393 = vld [vmem:[#allocation5 + $0x138] sm:$0xff]
        %v394 = vld [vmem:[#allocation5 + $0x140] sm:$0xff]
        %v395 = vld [vmem:[#allocation5 + $0x148] sm:$0xff]
        %v396 = vld [vmem:[#allocation5 + $0x150] sm:$0xff]
        %v397 = vld [vmem:[#allocation5 + $0x158] sm:$0xff]
        %v398 = vld [vmem:[#allocation5 + $0x160] sm:$0xff]
        %v399 = vld [vmem:[#allocation5 + $0x168] sm:$0xff]
        %v400 = vld [vmem:[#allocation5 + $0x170] sm:$0xff]
        %v401 = vld [vmem:[#allocation5 + $0x178] sm:$0xff]
        %v402 = vld [vmem:[#allocation5 + $0x180] sm:$0xff]
        %v403 = vld [vmem:[#allocation5 + $0x188] sm:$0xff]
        %v404 = vld [vmem:[#allocation5 + $0x190] sm:$0xff]
        %v405 = vld [vmem:[#allocation5 + $0x198] sm:$0xff]
        %v406 = vld [vmem:[#allocation5 + $0x1a0] sm:$0xff]
        %v407 = vld [vmem:[#allocation5 + $0x1a8] sm:$0xff]
        %v408 = vld [vmem:[#allocation5 + $0x1b0] sm:$0xff]
        %v409 = vld [vmem:[#allocation5 + $0x1b8] sm:$0xff]
        %v410 = vld [vmem:[#allocation5 + $0x1c0] sm:$0xff]
        %v411 = vld [vmem:[#allocation5 + $0x1c8] sm:$0xff]
        %v412 = vld [vmem:[#allocation5 + $0x1d0] sm:$0xff]
        %v413 = vld [vmem:[#allocation5 + $0x1d8] sm:$0xff]
        %v414 = vld [vmem:[#allocation5 + $0x1e0] sm:$0xff]
        %v415 = vld [vmem:[#allocation5 + $0x1e8] sm:$0xff]
        %v416 = vld [vmem:[#allocation5 + $0x1f0] sm:$0xff]
        %v417 = vld [vmem:[#allocation5 + $0x1f8] sm:$0xff]
        %v418 = vld [vmem:[#allocation5 + $0x200] sm:$0xff]
        %v419 = vld [vmem:[#allocation5 + $0x208] sm:$0xff]
        %v420 = vld [vmem:[#allocation5 + $0x210] sm:$0xff]
        %v421 = vld [vmem:[#allocation5 + $0x218] sm:$0xff]
        %v422 = vld [vmem:[#allocation5 + $0x220] sm:$0xff]
        %v423 = vld [vmem:[#allocation5 + $0x228] sm:$0xff]
        %v424 = vld [vmem:[#allocation5 + $0x230] sm:$0xff]
        %v425 = vld [vmem:[#allocation5 + $0x238] sm:$0xff]
        %v426 = vld [vmem:[#allocation5 + $0x240] sm:$0xff]
        %v427 = vld [vmem:[#allocation5 + $0x248] sm:$0xff]
        %v428 = vld [vmem:[#allocation5 + $0x250] sm:$0xff]
        %v429 = vld [vmem:[#allocation5 + $0x258] sm:$0xff]
        %v430 = vld [vmem:[#allocation5 + $0x260] sm:$0xff]
        %v431 = vld [vmem:[#allocation5 + $0x268] sm:$0xff]
        %v432 = vld [vmem:[#allocation5 + $0x270] sm:$0xff]
        %v433 = vld [vmem:[#allocation5 + $0x278] sm:$0xff]
        %v434 = vld [vmem:[#allocation5 + $0x280] sm:$0xff]
        %v435 = vld [vmem:[#allocation5 + $0x288] sm:$0xff]
        %v436 = vld [vmem:[#allocation5 + $0x290] sm:$0xff]
        %v437 = vld [vmem:[#allocation5 + $0x298] sm:$0xff]
        %v438 = vld [vmem:[#allocation5 + $0x2a0] sm:$0xff]
        %v439 = vld [vmem:[#allocation5 + $0x2a8] sm:$0xff]
        %v440 = vld [vmem:[#allocation5 + $0x2b0] sm:$0xff]
        %v441 = vld [vmem:[#allocation5 + $0x2b8] sm:$0xff]
        %v442 = vld [vmem:[#allocation5 + $0x2c0] sm:$0xff]
        %v443 = vld [vmem:[#allocation5 + $0x2c8] sm:$0xff]
        %v444 = vld [vmem:[#allocation5 + $0x2d0] sm:$0xff]
        %v445 = vld [vmem:[#allocation5 + $0x2d8] sm:$0xff]
        %v446 = vld [vmem:[#allocation5 + $0x2e0] sm:$0xff]
        %v447 = vld [vmem:[#allocation5 + $0x2e8] sm:$0xff]
        %v448 = vld [vmem:[#allocation5 + $0x2f0] sm:$0xff]
        %v449 = vld [vmem:[#allocation5 + $0x2f8] sm:$0xff]
        %v450 = vld [vmem:[#allocation5 + $0x300] sm:$0xff]
        %v451 = vld [vmem:[#allocation5 + $0x308] sm:$0xff]
        %v452 = vld [vmem:[#allocation5 + $0x310] sm:$0xff]
        %v453 = vld [vmem:[#allocation5 + $0x318] sm:$0xff]
        %v454 = vld [vmem:[#allocation5 + $0x320] sm:$0xff]
        %v455 = vld [vmem:[#allocation5 + $0x328] sm:$0xff]
        %v456 = vld [vmem:[#allocation5 + $0x330] sm:$0xff]
        %v457 = vld [vmem:[#allocation5 + $0x338] sm:$0xff]
        %v458 = vld [vmem:[#allocation5 + $0x340] sm:$0xff]
        %v459 = vld [vmem:[#allocation5 + $0x348] sm:$0xff]
        %v460 = vld [vmem:[#allocation5 + $0x350] sm:$0xff]
        %v461 = vld [vmem:[#allocation5 + $0x358] sm:$0xff]
        %v462 = vld [vmem:[#allocation5 + $0x360] sm:$0xff]
        %v463 = vld [vmem:[#allocation5 + $0x368] sm:$0xff]
        %v464 = vld [vmem:[#allocation5 + $0x370] sm:$0xff]
        %v465 = vld [vmem:[#allocation5 + $0x378] sm:$0xff]
        %v466 = vld [vmem:[#allocation5 + $0x380] sm:$0xff]
        %v467 = vld [vmem:[#allocation5 + $0x388] sm:$0xff]
        %v468 = vld [vmem:[#allocation5 + $0x390] sm:$0xff]
        %v469 = vld [vmem:[#allocation5 + $0x398] sm:$0xff]
        %v470 = vld [vmem:[#allocation5 + $0x3a0] sm:$0xff]
        %v471 = vld [vmem:[#allocation5 + $0x3a8] sm:$0xff]
        %v472 = vld [vmem:[#allocation5 + $0x3b0] sm:$0xff]
        %v473 = vld [vmem:[#allocation5 + $0x3b8] sm:$0xff]
        %v474 = vld [vmem:[#allocation5 + $0x3c0] sm:$0xff]
        %v475 = vld [vmem:[#allocation5 + $0x3c8] sm:$0xff]
        %v476 = vld [vmem:[#allocation5 + $0x3d0] sm:$0xff]
        %v477 = vld [vmem:[#allocation5 + $0x3d8] sm:$0xff]
        %v478 = vld [vmem:[#allocation5 + $0x3e0] sm:$0xff]
        %v479 = vld [vmem:[#allocation5 + $0x3e8] sm:$0xff]
        %v480 = vld [vmem:[#allocation5 + $0x3f0] sm:$0xff]
        %v481 = vld [vmem:[#allocation5 + $0x3f8] sm:$0xff]
        %v482 = vld [vmem:[#allocation5 + $0x400] sm:$0xff]
        %v483 = vld [vmem:[#allocation5 + $0x408] sm:$0xff]
        %v484 = vld [vmem:[#allocation5 + $0x410] sm:$0xff]
        %v485 = vld [vmem:[#allocation5 + $0x418] sm:$0xff]
        %v486 = vld [vmem:[#allocation5 + $0x420] sm:$0xff]
        %v487 = vld [vmem:[#allocation5 + $0x428] sm:$0xff]
        %v488 = vld [vmem:[#allocation5 + $0x430] sm:$0xff]
        %v489 = vld [vmem:[#allocation5 + $0x438] sm:$0xff]
        %v490 = vld [vmem:[#allocation5 + $0x440] sm:$0xff]
        %v491 = vld [vmem:[#allocation5 + $0x448] sm:$0xff]
        %v492 = vld [vmem:[#allocation5 + $0x450] sm:$0xff]
        %v493 = vld [vmem:[#allocation5 + $0x458] sm:$0xff]
        %v494 = vld [vmem:[#allocation5 + $0x460] sm:$0xff]
        %v495 = vld [vmem:[#allocation5 + $0x468] sm:$0xff]
        %v496 = vld [vmem:[#allocation5 + $0x470] sm:$0xff]
        %v497 = vld [vmem:[#allocation5 + $0x478] sm:$0xff]
        %v498 = vld [vmem:[#allocation5 + $0x480] sm:$0xff]
        %v499 = vld [vmem:[#allocation5 + $0x488] sm:$0xff]
        %v500 = vld [vmem:[#allocation5 + $0x490] sm:$0xff]
        %v501 = vld [vmem:[#allocation5 + $0x498] sm:$0xff]
        %v502 = vld [vmem:[#allocation5 + $0x4a0] sm:$0xff]
        %v503 = vld [vmem:[#allocation5 + $0x4a8] sm:$0xff]
        %v504 = vld [vmem:[#allocation5 + $0x4b0] sm:$0xff]
        %v505 = vld [vmem:[#allocation5 + $0x4b8] sm:$0xff]
        %v506 = vld [vmem:[#allocation5 + $0x4c0] sm:$0xff]
        %v507 = vld [vmem:[#allocation5 + $0x4c8] sm:$0xff]
        %v508 = vld [vmem:[#allocation5 + $0x4d0] sm:$0xff]
        %v509 = vld [vmem:[#allocation5 + $0x4d8] sm:$0xff]
        %v510 = vld [vmem:[#allocation5 + $0x4e0] sm:$0xff]
        %v511 = vld [vmem:[#allocation5 + $0x4e8] sm:$0xff]
        %v512 = vld [vmem:[#allocation5 + $0x4f0] sm:$0xff]
        %v513 = vld [vmem:[#allocation5 + $0x4f8] sm:$0xff]
        %v514 = vld [vmem:[#allocation5 + $0x500] sm:$0xff]
        %v515 = vld [vmem:[#allocation5 + $0x508] sm:$0xff]
        %v516 = vld [vmem:[#allocation5 + $0x510] sm:$0xff]
        %v517 = vld [vmem:[#allocation5 + $0x518] sm:$0xff]
        %v518 = vld [vmem:[#allocation5 + $0x520] sm:$0xff]
        %v519 = vld [vmem:[#allocation5 + $0x528] sm:$0xff]
        %v520 = vld [vmem:[#allocation5 + $0x530] sm:$0xff]
        %v521 = vld [vmem:[#allocation5 + $0x538] sm:$0xff]
        %v522 = vld [vmem:[#allocation5 + $0x540] sm:$0xff]
        %v523 = vld [vmem:[#allocation5 + $0x548] sm:$0xff]
        %v524 = vld [vmem:[#allocation5 + $0x550] sm:$0xff]
        %v525 = vld [vmem:[#allocation5 + $0x558] sm:$0xff]
        %v526 = vld [vmem:[#allocation5 + $0x560] sm:$0xff]
        %v527 = vld [vmem:[#allocation5 + $0x568] sm:$0xff]
        %v528 = vld [vmem:[#allocation5 + $0x570] sm:$0xff]
        %v529 = vld [vmem:[#allocation5 + $0x578] sm:$0xff]
        %v530 = vld [vmem:[#allocation5 + $0x580] sm:$0xff]
        %v531 = vld [vmem:[#allocation5 + $0x588] sm:$0xff]
        %v532 = vld [vmem:[#allocation5 + $0x590] sm:$0xff]
        %v533 = vld [vmem:[#allocation5 + $0x598] sm:$0xff]
        %v534 = vld [vmem:[#allocation5 + $0x5a0] sm:$0xff]
        %v535 = vld [vmem:[#allocation5 + $0x5a8] sm:$0xff]
        %v536 = vld [vmem:[#allocation5 + $0x5b0] sm:$0xff]
        %v537 = vld [vmem:[#allocation5 + $0x5b8] sm:$0xff]
        %v538 = vld [vmem:[#allocation5 + $0x5c0] sm:$0xff]
        %v539 = vld [vmem:[#allocation5 + $0x5c8] sm:$0xff]
        %v540 = vld [vmem:[#allocation5 + $0x5d0] sm:$0xff]
        %v541 = vld [vmem:[#allocation5 + $0x5d8] sm:$0xff]
        %v542 = vld [vmem:[#allocation5 + $0x5e0] sm:$0xff]
        %v543 = vld [vmem:[#allocation5 + $0x5e8] sm:$0xff]
        %v544 = vld [vmem:[#allocation5 + $0x5f0] sm:$0xff]
        %v545 = vld [vmem:[#allocation5 + $0x5f8] sm:$0xff]
        %v546 = vld [vmem:[#allocation5 + $0x600] sm:$0xff]
        %v547 = vld [vmem:[#allocation5 + $0x608] sm:$0xff]
        %v548 = vld [vmem:[#allocation5 + $0x610] sm:$0xff]
        %v549 = vld [vmem:[#allocation5 + $0x618] sm:$0xff]
        %v550 = vld [vmem:[#allocation5 + $0x620] sm:$0xff]
        %v551 = vld [vmem:[#allocation5 + $0x628] sm:$0xff]
        %v552 = vld [vmem:[#allocation5 + $0x630] sm:$0xff]
        %v553 = vld [vmem:[#allocation5 + $0x638] sm:$0xff]
        %v554 = vld [vmem:[#allocation5 + $0x640] sm:$0xff]
        %v555 = vld [vmem:[#allocation5 + $0x648] sm:$0xff]
        %v556 = vld [vmem:[#allocation5 + $0x650] sm:$0xff]
        %v557 = vld [vmem:[#allocation5 + $0x658] sm:$0xff]
        %v558 = vld [vmem:[#allocation5 + $0x660] sm:$0xff]
        %v559 = vld [vmem:[#allocation5 + $0x668] sm:$0xff]
        %v560 = vld [vmem:[#allocation5 + $0x670] sm:$0xff]
        %v561 = vld [vmem:[#allocation5 + $0x678] sm:$0xff]
        %v562 = vld [vmem:[#allocation5 + $0x680] sm:$0xff]
        %v563 = vld [vmem:[#allocation5 + $0x688] sm:$0xff]
        %v564 = vld [vmem:[#allocation5 + $0x690] sm:$0xff]
        %v565 = vld [vmem:[#allocation5 + $0x698] sm:$0xff]
        %v566 = vld [vmem:[#allocation5 + $0x6a0] sm:$0xff]
        %v567 = vld [vmem:[#allocation5 + $0x6a8] sm:$0xff]
        %v568 = vld [vmem:[#allocation5 + $0x6b0] sm:$0xff]
        %v569 = vld [vmem:[#allocation5 + $0x6b8] sm:$0xff]
        %v570 = vld [vmem:[#allocation5 + $0x6c0] sm:$0xff]
        %v571 = vld [vmem:[#allocation5 + $0x6c8] sm:$0xff]
        %v572 = vld [vmem:[#allocation5 + $0x6d0] sm:$0xff]
        %v573 = vld [vmem:[#allocation5 + $0x6d8] sm:$0xff]
        %v574 = vld [vmem:[#allocation5 + $0x6e0] sm:$0xff]
        %v575 = vld [vmem:[#allocation5 + $0x6e8] sm:$0xff]
        %v576 = vld [vmem:[#allocation5 + $0x6f0] sm:$0xff]
        %v577 = vld [vmem:[#allocation5 + $0x6f8] sm:$0xff]
        %v578 = vld [vmem:[#allocation5 + $0x700] sm:$0xff]
        %v579 = vld [vmem:[#allocation5 + $0x708] sm:$0xff]
        %v580 = vld [vmem:[#allocation5 + $0x710] sm:$0xff]
        %v581 = vld [vmem:[#allocation5 + $0x718] sm:$0xff]
        %v582 = vld [vmem:[#allocation5 + $0x720] sm:$0xff]
        %v583 = vld [vmem:[#allocation5 + $0x728] sm:$0xff]
        %v584 = vld [vmem:[#allocation5 + $0x730] sm:$0xff]
        %v585 = vld [vmem:[#allocation5 + $0x738] sm:$0xff]
        %v586 = vld [vmem:[#allocation5 + $0x740] sm:$0xff]
        %v587 = vld [vmem:[#allocation5 + $0x748] sm:$0xff]
        %v588 = vld [vmem:[#allocation5 + $0x750] sm:$0xff]
        %v589 = vld [vmem:[#allocation5 + $0x758] sm:$0xff]
        %v590 = vld [vmem:[#allocation5 + $0x760] sm:$0xff]
        %v591 = vld [vmem:[#allocation5 + $0x768] sm:$0xff]
        %v592 = vld [vmem:[#allocation5 + $0x770] sm:$0xff]
        %v593 = vld [vmem:[#allocation5 + $0x778] sm:$0xff]
        %v594 = vld [vmem:[#allocation5 + $0x780] sm:$0xff]
        %v595 = vld [vmem:[#allocation5 + $0x788] sm:$0xff]
        %v596 = vld [vmem:[#allocation5 + $0x790] sm:$0xff]
        %v597 = vld [vmem:[#allocation5 + $0x798] sm:$0xff]
        %v598 = vld [vmem:[#allocation5 + $0x7a0] sm:$0xff]
        %v599 = vld [vmem:[#allocation5 + $0x7a8] sm:$0xff]
        %v600 = vld [vmem:[#allocation5 + $0x7b0] sm:$0xff]
        %v601 = vld [vmem:[#allocation5 + $0x7b8] sm:$0xff]
        %v602 = vld [vmem:[#allocation5 + $0x7c0] sm:$0xff]
        %v603 = vld [vmem:[#allocation5 + $0x7c8] sm:$0xff]
        %v604 = vld [vmem:[#allocation5 + $0x7d0] sm:$0xff]
        %v605 = vld [vmem:[#allocation5 + $0x7d8] sm:$0xff]
        %v606 = vld [vmem:[#allocation5 + $0x7e0] sm:$0xff]
        %v607 = vld [vmem:[#allocation5 + $0x7e8] sm:$0xff]
        %v608 = vld [vmem:[#allocation5 + $0x7f0] sm:$0xff]
        %v609 = vld [vmem:[#allocation5 + $0x7f8] sm:$0xff]
        %v610 = vld [vmem:[%s2] sm:$0x3]
        %v612 = vperm.slane %v610, 0
        %v613 = vperm.slane %v610, 1
        %616 = vmatpush.msra.mxu0 %v384
        %617 = vmatpush.msra.mxu0 %v382
        %618 = vmatpush.msra.mxu0 %v380
        %619 = vmatpush.msra.mxu0 %v378
        %620 = vmatpush.msra.mxu0 %v376
        %621 = vmatpush.msra.mxu0 %v374
        %622 = vmatpush.msra.mxu0 %v372
        %623 = vmatpush.msra.mxu0 %v370
        %624 = vmatpush.msra.mxu0 %v368
        %625 = vmatpush.msra.mxu0 %v366
        %626 = vmatpush.msra.mxu0 %v364
        %627 = vmatpush.msra.mxu0 %v362
        %628 = vmatpush.msra.mxu0 %v360
        %629 = vmatpush.msra.mxu0 %v358
        %630 = vmatpush.msra.mxu0 %v356
        %631 = vmatpush.msra.mxu0 %v354
        %632 = vmatmul.f32.gmra.mxu0 %v338
        %v633 = vpop.f32.mrf.mxu0
        %v634 = vadd.f32 %v612, %v633
        %635 = vmatmul.f32.gmra.mxu0 %v346
        %v636 = vpop.f32.mrf.mxu0
        %v637 = vadd.f32 %v612, %v636
        %638 = vdwg.mxu0
        %639 = vmatpush.msra.mxu0 %v416
        %640 = vmatpush.msra.mxu0 %v414
        %641 = vmatpush.msra.mxu0 %v412
        %642 = vmatpush.msra.mxu0 %v410
        %643 = vmatpush.msra.mxu0 %v408
        %644 = vmatpush.msra.mxu0 %v406
        %645 = vmatpush.msra.mxu0 %v404
        %646 = vmatpush.msra.mxu0 %v402
        %647 = vmatpush.msra.mxu0 %v400
        %648 = vmatpush.msra.mxu0 %v398
        %649 = vmatpush.msra.mxu0 %v396
        %650 = vmatpush.msra.mxu0 %v394
        %651 = vmatpush.msra.mxu0 %v392
        %652 = vmatpush.msra.mxu0 %v390
        %653 = vmatpush.msra.mxu0 %v388
        %654 = vmatpush.msra.mxu0 %v386
        %655 = vmatmul.f32.gmra.mxu0 %v339
        %v656 = vpop.f32.mrf.mxu0
        %v657 = vadd.f32 %v634, %v656
        %658 = vmatmul.f32.gmra.mxu0 %v347
        %v659 = vpop.f32.mrf.mxu0
        %v660 = vadd.f32 %v637, %v659
        %661 = vdwg.mxu0
        %662 = vmatpush.msra.mxu0 %v448
        %663 = vmatpush.msra.mxu0 %v446
        %664 = vmatpush.msra.mxu0 %v444
        %665 = vmatpush.msra.mxu0 %v442
        %666 = vmatpush.msra.mxu0 %v440
        %667 = vmatpush.msra.mxu0 %v438
        %668 = vmatpush.msra.mxu0 %v436
        %669 = vmatpush.msra.mxu0 %v434
        %670 = vmatpush.msra.mxu0 %v432
        %671 = vmatpush.msra.mxu0 %v430
        %672 = vmatpush.msra.mxu0 %v428
        %673 = vmatpush.msra.mxu0 %v426
        %674 = vmatpush.msra.mxu0 %v424
        %675 = vmatpush.msra.mxu0 %v422
        %676 = vmatpush.msra.mxu0 %v420
        %677 = vmatpush.msra.mxu0 %v418
        %678 = vmatmul.f32.gmra.mxu0 %v340
        %v679 = vpop.f32.mrf.mxu0
        %v680 = vadd.f32 %v657, %v679
        %681 = vmatmul.f32.gmra.mxu0 %v348
        %v682 = vpop.f32.mrf.mxu0
        %v683 = vadd.f32 %v660, %v682
        %684 = vdwg.mxu0
        %685 = vmatpush.msra.mxu0 %v480
        %686 = vmatpush.msra.mxu0 %v478
        %687 = vmatpush.msra.mxu0 %v476
        %688 = vmatpush.msra.mxu0 %v474
        %689 = vmatpush.msra.mxu0 %v472
        %690 = vmatpush.msra.mxu0 %v470
        %691 = vmatpush.msra.mxu0 %v468
        %692 = vmatpush.msra.mxu0 %v466
        %693 = vmatpush.msra.mxu0 %v464
        %694 = vmatpush.msra.mxu0 %v462
        %695 = vmatpush.msra.mxu0 %v460
        %696 = vmatpush.msra.mxu0 %v458
        %697 = vmatpush.msra.mxu0 %v456
        %698 = vmatpush.msra.mxu0 %v454
        %699 = vmatpush.msra.mxu0 %v452
        %700 = vmatpush.msra.mxu0 %v450
        %701 = vmatmul.f32.gmra.mxu0 %v341
        %v702 = vpop.f32.mrf.mxu0
        %v703 = vadd.f32 %v680, %v702
        %704 = vmatmul.f32.gmra.mxu0 %v349
        %v705 = vpop.f32.mrf.mxu0
        %v706 = vadd.f32 %v683, %v705
        %707 = vdwg.mxu0
        %708 = vmatpush.msra.mxu0 %v512
        %709 = vmatpush.msra.mxu0 %v510
        %710 = vmatpush.msra.mxu0 %v508
        %711 = vmatpush.msra.mxu0 %v506
        %712 = vmatpush.msra.mxu0 %v504
        %713 = vmatpush.msra.mxu0 %v502
        %714 = vmatpush.msra.mxu0 %v500
        %715 = vmatpush.msra.mxu0 %v498
        %716 = vmatpush.msra.mxu0 %v496
        %717 = vmatpush.msra.mxu0 %v494
        %718 = vmatpush.msra.mxu0 %v492
        %719 = vmatpush.msra.mxu0 %v490
        %720 = vmatpush.msra.mxu0 %v488
        %721 = vmatpush.msra.mxu0 %v486
        %722 = vmatpush.msra.mxu0 %v484
        %723 = vmatpush.msra.mxu0 %v482
        %724 = vmatmul.f32.gmra.mxu0 %v342
        %v725 = vpop.f32.mrf.mxu0
        %v726 = vadd.f32 %v703, %v725
        %727 = vmatmul.f32.gmra.mxu0 %v350
        %v728 = vpop.f32.mrf.mxu0
        %v729 = vadd.f32 %v706, %v728
        %730 = vdwg.mxu0
        %731 = vmatpush.msra.mxu0 %v544
        %732 = vmatpush.msra.mxu0 %v542
        %733 = vmatpush.msra.mxu0 %v540
        %734 = vmatpush.msra.mxu0 %v538
        %735 = vmatpush.msra.mxu0 %v536
        %736 = vmatpush.msra.mxu0 %v534
        %737 = vmatpush.msra.mxu0 %v532
        %738 = vmatpush.msra.mxu0 %v530
        %739 = vmatpush.msra.mxu0 %v528
        %740 = vmatpush.msra.mxu0 %v526
        %741 = vmatpush.msra.mxu0 %v524
        %742 = vmatpush.msra.mxu0 %v522
        %743 = vmatpush.msra.mxu0 %v520
        %744 = vmatpush.msra.mxu0 %v518
        %745 = vmatpush.msra.mxu0 %v516
        %746 = vmatpush.msra.mxu0 %v514
        %747 = vmatmul.f32.gmra.mxu0 %v343
        %v748 = vpop.f32.mrf.mxu0
        %v749 = vadd.f32 %v726, %v748
        %750 = vmatmul.f32.gmra.mxu0 %v351
        %v751 = vpop.f32.mrf.mxu0
        %v752 = vadd.f32 %v729, %v751
        %753 = vdwg.mxu0
        %754 = vmatpush.msra.mxu0 %v576
        %755 = vmatpush.msra.mxu0 %v574
        %756 = vmatpush.msra.mxu0 %v572
        %757 = vmatpush.msra.mxu0 %v570
        %758 = vmatpush.msra.mxu0 %v568
        %759 = vmatpush.msra.mxu0 %v566
        %760 = vmatpush.msra.mxu0 %v564
        %761 = vmatpush.msra.mxu0 %v562
        %762 = vmatpush.msra.mxu0 %v560
        %763 = vmatpush.msra.mxu0 %v558
        %764 = vmatpush.msra.mxu0 %v556
        %765 = vmatpush.msra.mxu0 %v554
        %766 = vmatpush.msra.mxu0 %v552
        %767 = vmatpush.msra.mxu0 %v550
        %768 = vmatpush.msra.mxu0 %v548
        %769 = vmatpush.msra.mxu0 %v546
        %770 = vmatmul.f32.gmra.mxu0 %v344
        %v771 = vpop.f32.mrf.mxu0
        %v772 = vadd.f32 %v749, %v771
        %773 = vmatmul.f32.gmra.mxu0 %v352
        %v774 = vpop.f32.mrf.mxu0
        %v775 = vadd.f32 %v752, %v774
        %776 = vdwg.mxu0
        %777 = vmatpush.msra.mxu0 %v608
        %778 = vmatpush.msra.mxu0 %v606
        %779 = vmatpush.msra.mxu0 %v604
        %780 = vmatpush.msra.mxu0 %v602
        %781 = vmatpush.msra.mxu0 %v600
        %782 = vmatpush.msra.mxu0 %v598
        %783 = vmatpush.msra.mxu0 %v596
        %784 = vmatpush.msra.mxu0 %v594
        %785 = vmatpush.msra.mxu0 %v592
        %786 = vmatpush.msra.mxu0 %v590
        %787 = vmatpush.msra.mxu0 %v588
        %788 = vmatpush.msra.mxu0 %v586
        %789 = vmatpush.msra.mxu0 %v584
        %790 = vmatpush.msra.mxu0 %v582
        %791 = vmatpush.msra.mxu0 %v580
        %792 = vmatpush.msra.mxu0 %v578
        %793 = vmatmul.f32.gmra.mxu0 %v345
        %v794 = vpop.f32.mrf.mxu0
        %v795 = vadd.f32 %v772, %v794
        %796 = vmatmul.f32.gmra.mxu0 %v353
        %v797 = vpop.f32.mrf.mxu0
        %v798 = vadd.f32 %v775, %v797
        %799 = vdwg.mxu0
        %800 = vmatpush.msra.mxu0 %v385
        %801 = vmatpush.msra.mxu0 %v383
        %802 = vmatpush.msra.mxu0 %v381
        %803 = vmatpush.msra.mxu0 %v379
        %804 = vmatpush.msra.mxu0 %v377
        %805 = vmatpush.msra.mxu0 %v375
        %806 = vmatpush.msra.mxu0 %v373
        %807 = vmatpush.msra.mxu0 %v371
        %808 = vmatpush.msra.mxu0 %v369
        %809 = vmatpush.msra.mxu0 %v367
        %810 = vmatpush.msra.mxu0 %v365
        %811 = vmatpush.msra.mxu0 %v363
        %812 = vmatpush.msra.mxu0 %v361
        %813 = vmatpush.msra.mxu0 %v359
        %814 = vmatpush.msra.mxu0 %v357
        %815 = vmatpush.msra.mxu0 %v355
        %816 = vmatmul.f32.gmra.mxu0 %v338
        %v817 = vpop.f32.mrf.mxu0
        %v818 = vadd.f32 %v613, %v817
        %819 = vmatmul.f32.gmra.mxu0 %v346
        %v820 = vpop.f32.mrf.mxu0
        %v821 = vadd.f32 %v613, %v820
        %822 = vdwg.mxu0
        %823 = vmatpush.msra.mxu0 %v417
        %824 = vmatpush.msra.mxu0 %v415
        %825 = vmatpush.msra.mxu0 %v413
        %826 = vmatpush.msra.mxu0 %v411
        %827 = vmatpush.msra.mxu0 %v409
        %828 = vmatpush.msra.mxu0 %v407
        %829 = vmatpush.msra.mxu0 %v405
        %830 = vmatpush.msra.mxu0 %v403
        %831 = vmatpush.msra.mxu0 %v401
        %832 = vmatpush.msra.mxu0 %v399
        %833 = vmatpush.msra.mxu0 %v397
        %834 = vmatpush.msra.mxu0 %v395
        %835 = vmatpush.msra.mxu0 %v393
        %836 = vmatpush.msra.mxu0 %v391
        %837 = vmatpush.msra.mxu0 %v389
        %838 = vmatpush.msra.mxu0 %v387
        %839 = vmatmul.f32.gmra.mxu0 %v339
        %v840 = vpop.f32.mrf.mxu0
        %v841 = vadd.f32 %v818, %v840
        %842 = vmatmul.f32.gmra.mxu0 %v347
        %v843 = vpop.f32.mrf.mxu0
        %v844 = vadd.f32 %v821, %v843
        %845 = vdwg.mxu0
        %846 = vmatpush.msra.mxu0 %v449
        %847 = vmatpush.msra.mxu0 %v447
        %848 = vmatpush.msra.mxu0 %v445
        %849 = vmatpush.msra.mxu0 %v443
        %850 = vmatpush.msra.mxu0 %v441
        %851 = vmatpush.msra.mxu0 %v439
        %852 = vmatpush.msra.mxu0 %v437
        %853 = vmatpush.msra.mxu0 %v435
        %854 = vmatpush.msra.mxu0 %v433
        %855 = vmatpush.msra.mxu0 %v431
        %856 = vmatpush.msra.mxu0 %v429
        %857 = vmatpush.msra.mxu0 %v427
        %858 = vmatpush.msra.mxu0 %v425
        %859 = vmatpush.msra.mxu0 %v423
        %860 = vmatpush.msra.mxu0 %v421
        %861 = vmatpush.msra.mxu0 %v419
        %862 = vmatmul.f32.gmra.mxu0 %v340
        %v863 = vpop.f32.mrf.mxu0
        %v864 = vadd.f32 %v841, %v863
        %865 = vmatmul.f32.gmra.mxu0 %v348
        %v866 = vpop.f32.mrf.mxu0
        %v867 = vadd.f32 %v844, %v866
        %868 = vdwg.mxu0
        %869 = vmatpush.msra.mxu0 %v481
        %870 = vmatpush.msra.mxu0 %v479
        %871 = vmatpush.msra.mxu0 %v477
        %872 = vmatpush.msra.mxu0 %v475
        %873 = vmatpush.msra.mxu0 %v473
        %874 = vmatpush.msra.mxu0 %v471
        %875 = vmatpush.msra.mxu0 %v469
        %876 = vmatpush.msra.mxu0 %v467
        %877 = vmatpush.msra.mxu0 %v465
        %878 = vmatpush.msra.mxu0 %v463
        %879 = vmatpush.msra.mxu0 %v461
        %880 = vmatpush.msra.mxu0 %v459
        %881 = vmatpush.msra.mxu0 %v457
        %882 = vmatpush.msra.mxu0 %v455
        %883 = vmatpush.msra.mxu0 %v453
        %884 = vmatpush.msra.mxu0 %v451
        %885 = vmatmul.f32.gmra.mxu0 %v341
        %v886 = vpop.f32.mrf.mxu0
        %v887 = vadd.f32 %v864, %v886
        %888 = vmatmul.f32.gmra.mxu0 %v349
        %v889 = vpop.f32.mrf.mxu0
        %v890 = vadd.f32 %v867, %v889
        %891 = vdwg.mxu0
        %892 = vmatpush.msra.mxu0 %v513
        %893 = vmatpush.msra.mxu0 %v511
        %894 = vmatpush.msra.mxu0 %v509
        %895 = vmatpush.msra.mxu0 %v507
        %896 = vmatpush.msra.mxu0 %v505
        %897 = vmatpush.msra.mxu0 %v503
        %898 = vmatpush.msra.mxu0 %v501
        %899 = vmatpush.msra.mxu0 %v499
        %900 = vmatpush.msra.mxu0 %v497
        %901 = vmatpush.msra.mxu0 %v495
        %902 = vmatpush.msra.mxu0 %v493
        %903 = vmatpush.msra.mxu0 %v491
        %904 = vmatpush.msra.mxu0 %v489
        %905 = vmatpush.msra.mxu0 %v487
        %906 = vmatpush.msra.mxu0 %v485
        %907 = vmatpush.msra.mxu0 %v483
        %908 = vmatmul.f32.gmra.mxu0 %v342
        %v909 = vpop.f32.mrf.mxu0
        %v910 = vadd.f32 %v887, %v909
        %911 = vmatmul.f32.gmra.mxu0 %v350
        %v912 = vpop.f32.mrf.mxu0
        %v913 = vadd.f32 %v890, %v912
        %914 = vdwg.mxu0
        %915 = vmatpush.msra.mxu0 %v545
        %916 = vmatpush.msra.mxu0 %v543
        %917 = vmatpush.msra.mxu0 %v541
        %918 = vmatpush.msra.mxu0 %v539
        %919 = vmatpush.msra.mxu0 %v537
        %920 = vmatpush.msra.mxu0 %v535
        %921 = vmatpush.msra.mxu0 %v533
        %922 = vmatpush.msra.mxu0 %v531
        %923 = vmatpush.msra.mxu0 %v529
        %924 = vmatpush.msra.mxu0 %v527
        %925 = vmatpush.msra.mxu0 %v525
        %926 = vmatpush.msra.mxu0 %v523
        %927 = vmatpush.msra.mxu0 %v521
        %928 = vmatpush.msra.mxu0 %v519
        %929 = vmatpush.msra.mxu0 %v517
        %930 = vmatpush.msra.mxu0 %v515
        %931 = vmatmul.f32.gmra.mxu0 %v343
        %v932 = vpop.f32.mrf.mxu0
        %v933 = vadd.f32 %v910, %v932
        %934 = vmatmul.f32.gmra.mxu0 %v351
        %v935 = vpop.f32.mrf.mxu0
        %v936 = vadd.f32 %v913, %v935
        %937 = vdwg.mxu0
        %938 = vmatpush.msra.mxu0 %v577
        %939 = vmatpush.msra.mxu0 %v575
        %940 = vmatpush.msra.mxu0 %v573
        %941 = vmatpush.msra.mxu0 %v571
        %942 = vmatpush.msra.mxu0 %v569
        %943 = vmatpush.msra.mxu0 %v567
        %944 = vmatpush.msra.mxu0 %v565
        %945 = vmatpush.msra.mxu0 %v563
        %946 = vmatpush.msra.mxu0 %v561
        %947 = vmatpush.msra.mxu0 %v559
        %948 = vmatpush.msra.mxu0 %v557
        %949 = vmatpush.msra.mxu0 %v555
        %950 = vmatpush.msra.mxu0 %v553
        %951 = vmatpush.msra.mxu0 %v551
        %952 = vmatpush.msra.mxu0 %v549
        %953 = vmatpush.msra.mxu0 %v547
        %954 = vmatmul.f32.gmra.mxu0 %v344
        %v955 = vpop.f32.mrf.mxu0
        %v956 = vadd.f32 %v933, %v955
        %957 = vmatmul.f32.gmra.mxu0 %v352
        %v958 = vpop.f32.mrf.mxu0
        %v959 = vadd.f32 %v936, %v958
        %960 = vdwg.mxu0
        %961 = vmatpush.msra.mxu0 %v609
        %962 = vmatpush.msra.mxu0 %v607
        %963 = vmatpush.msra.mxu0 %v605
        %964 = vmatpush.msra.mxu0 %v603
        %965 = vmatpush.msra.mxu0 %v601
        %966 = vmatpush.msra.mxu0 %v599
        %967 = vmatpush.msra.mxu0 %v597
        %968 = vmatpush.msra.mxu0 %v595
        %969 = vmatpush.msra.mxu0 %v593
        %970 = vmatpush.msra.mxu0 %v591
        %971 = vmatpush.msra.mxu0 %v589
        %972 = vmatpush.msra.mxu0 %v587
        %973 = vmatpush.msra.mxu0 %v585
        %974 = vmatpush.msra.mxu0 %v583
        %975 = vmatpush.msra.mxu0 %v581
        %976 = vmatpush.msra.mxu0 %v579
        %977 = vmatmul.f32.gmra.mxu0 %v345
        %v978 = vpop.f32.mrf.mxu0
        %v979 = vadd.f32 %v956, %v978
        %980 = vmatmul.f32.gmra.mxu0 %v353
        %v981 = vpop.f32.mrf.mxu0
        %v982 = vadd.f32 %v959, %v981
        %983 = vdwg.mxu0
        %v984 = vtanh.pop %v795
        %v985 = vtanh.pop %v979
        %v986 = vtanh.pop %v798
        %v987 = vtanh.pop %v982
        %v988 = vld [vmem:[#allocation7] sm:$0xff]
        %v989 = vld [vmem:[#allocation7 + $0x8] sm:$0xff]
        %v990 = vld [vmem:[#allocation7 + $0x10] sm:$0xff]
        %v991 = vld [vmem:[#allocation7 + $0x18] sm:$0xff]
        %v992 = vld [vmem:[#allocation7 + $0x20] sm:$0xff]
        %v993 = vld [vmem:[#allocation7 + $0x28] sm:$0xff]
        %v994 = vld [vmem:[#allocation7 + $0x30] sm:$0xff]
        %v995 = vld [vmem:[#allocation7 + $0x38] sm:$0xff]
        %v996 = vld [vmem:[#allocation7 + $0x40] sm:$0xff]
        %v997 = vld [vmem:[#allocation7 + $0x48] sm:$0xff]
        %v998 = vld [vmem:[#allocation7 + $0x50] sm:$0xff]
        %v999 = vld [vmem:[#allocation7 + $0x58] sm:$0xff]
        %v1000 = vld [vmem:[#allocation7 + $0x60] sm:$0xff]
        %v1001 = vld [vmem:[#allocation7 + $0x68] sm:$0xff]
        %v1002 = vld [vmem:[#allocation7 + $0x70] sm:$0xff]
        %v1003 = vld [vmem:[#allocation7 + $0x78] sm:$0xff]
        %v1004 = vld [vmem:[#allocation7 + $0x80] sm:$0xff]
        %v1005 = vld [vmem:[#allocation7 + $0x88] sm:$0xff]
        %v1006 = vld [vmem:[#allocation7 + $0x90] sm:$0xff]
        %v1007 = vld [vmem:[#allocation7 + $0x98] sm:$0xff]
        %v1008 = vld [vmem:[#allocation7 + $0xa0] sm:$0xff]
        %v1009 = vld [vmem:[#allocation7 + $0xa8] sm:$0xff]
        %v1010 = vld [vmem:[#allocation7 + $0xb0] sm:$0xff]
        %v1011 = vld [vmem:[#allocation7 + $0xb8] sm:$0xff]
        %v1012 = vld [vmem:[#allocation7 + $0xc0] sm:$0xff]
        %v1013 = vld [vmem:[#allocation7 + $0xc8] sm:$0xff]
        %v1014 = vld [vmem:[#allocation7 + $0xd0] sm:$0xff]
        %v1015 = vld [vmem:[#allocation7 + $0xd8] sm:$0xff]
        %v1016 = vld [vmem:[#allocation7 + $0xe0] sm:$0xff]
        %v1017 = vld [vmem:[#allocation7 + $0xe8] sm:$0xff]
        %v1018 = vld [vmem:[#allocation7 + $0xf0] sm:$0xff]
        %v1019 = vld [vmem:[#allocation7 + $0xf8] sm:$0xff]
        %v1020 = vld [vmem:[#allocation7 + $0x100] sm:$0xff]
        %v1021 = vld [vmem:[#allocation7 + $0x108] sm:$0xff]
        %v1022 = vld [vmem:[#allocation7 + $0x110] sm:$0xff]
        %v1023 = vld [vmem:[#allocation7 + $0x118] sm:$0xff]
        %v1024 = vld [vmem:[#allocation7 + $0x120] sm:$0xff]
        %v1025 = vld [vmem:[#allocation7 + $0x128] sm:$0xff]
        %v1026 = vld [vmem:[#allocation7 + $0x130] sm:$0xff]
        %v1027 = vld [vmem:[#allocation7 + $0x138] sm:$0xff]
        %v1028 = vld [vmem:[#allocation7 + $0x140] sm:$0xff]
        %v1029 = vld [vmem:[#allocation7 + $0x148] sm:$0xff]
        %v1030 = vld [vmem:[#allocation7 + $0x150] sm:$0xff]
        %v1031 = vld [vmem:[#allocation7 + $0x158] sm:$0xff]
        %v1032 = vld [vmem:[#allocation7 + $0x160] sm:$0xff]
        %v1033 = vld [vmem:[#allocation7 + $0x168] sm:$0xff]
        %v1034 = vld [vmem:[#allocation7 + $0x170] sm:$0xff]
        %v1035 = vld [vmem:[#allocation7 + $0x178] sm:$0xff]
        %v1036 = vld [vmem:[#allocation7 + $0x180] sm:$0xff]
        %v1037 = vld [vmem:[#allocation7 + $0x188] sm:$0xff]
        %v1038 = vld [vmem:[#allocation7 + $0x190] sm:$0xff]
        %v1039 = vld [vmem:[#allocation7 + $0x198] sm:$0xff]
        %v1040 = vld [vmem:[#allocation7 + $0x1a0] sm:$0xff]
        %v1041 = vld [vmem:[#allocation7 + $0x1a8] sm:$0xff]
        %v1042 = vld [vmem:[#allocation7 + $0x1b0] sm:$0xff]
        %v1043 = vld [vmem:[#allocation7 + $0x1b8] sm:$0xff]
        %v1044 = vld [vmem:[#allocation7 + $0x1c0] sm:$0xff]
        %v1045 = vld [vmem:[#allocation7 + $0x1c8] sm:$0xff]
        %v1046 = vld [vmem:[#allocation7 + $0x1d0] sm:$0xff]
        %v1047 = vld [vmem:[#allocation7 + $0x1d8] sm:$0xff]
        %v1048 = vld [vmem:[#allocation7 + $0x1e0] sm:$0xff]
        %v1049 = vld [vmem:[#allocation7 + $0x1e8] sm:$0xff]
        %v1050 = vld [vmem:[#allocation7 + $0x1f0] sm:$0xff]
        %v1051 = vld [vmem:[#allocation7 + $0x1f8] sm:$0xff]
        %v1052 = vld [vmem:[#allocation7 + $0x200] sm:$0xff]
        %v1053 = vld [vmem:[#allocation7 + $0x208] sm:$0xff]
        %v1054 = vld [vmem:[#allocation7 + $0x210] sm:$0xff]
        %v1055 = vld [vmem:[#allocation7 + $0x218] sm:$0xff]
        %v1056 = vld [vmem:[#allocation7 + $0x220] sm:$0xff]
        %v1057 = vld [vmem:[#allocation7 + $0x228] sm:$0xff]
        %v1058 = vld [vmem:[#allocation7 + $0x230] sm:$0xff]
        %v1059 = vld [vmem:[#allocation7 + $0x238] sm:$0xff]
        %v1060 = vld [vmem:[#allocation7 + $0x240] sm:$0xff]
        %v1061 = vld [vmem:[#allocation7 + $0x248] sm:$0xff]
        %v1062 = vld [vmem:[#allocation7 + $0x250] sm:$0xff]
        %v1063 = vld [vmem:[#allocation7 + $0x258] sm:$0xff]
        %v1064 = vld [vmem:[#allocation7 + $0x260] sm:$0xff]
        %v1065 = vld [vmem:[#allocation7 + $0x268] sm:$0xff]
        %v1066 = vld [vmem:[#allocation7 + $0x270] sm:$0xff]
        %v1067 = vld [vmem:[#allocation7 + $0x278] sm:$0xff]
        %v1068 = vld [vmem:[#allocation7 + $0x280] sm:$0xff]
        %v1069 = vld [vmem:[#allocation7 + $0x288] sm:$0xff]
        %v1070 = vld [vmem:[#allocation7 + $0x290] sm:$0xff]
        %v1071 = vld [vmem:[#allocation7 + $0x298] sm:$0xff]
        %v1072 = vld [vmem:[#allocation7 + $0x2a0] sm:$0xff]
        %v1073 = vld [vmem:[#allocation7 + $0x2a8] sm:$0xff]
        %v1074 = vld [vmem:[#allocation7 + $0x2b0] sm:$0xff]
        %v1075 = vld [vmem:[#allocation7 + $0x2b8] sm:$0xff]
        %v1076 = vld [vmem:[#allocation7 + $0x2c0] sm:$0xff]
        %v1077 = vld [vmem:[#allocation7 + $0x2c8] sm:$0xff]
        %v1078 = vld [vmem:[#allocation7 + $0x2d0] sm:$0xff]
        %v1079 = vld [vmem:[#allocation7 + $0x2d8] sm:$0xff]
        %v1080 = vld [vmem:[#allocation7 + $0x2e0] sm:$0xff]
        %v1081 = vld [vmem:[#allocation7 + $0x2e8] sm:$0xff]
        %v1082 = vld [vmem:[#allocation7 + $0x2f0] sm:$0xff]
        %v1083 = vld [vmem:[#allocation7 + $0x2f8] sm:$0xff]
        %v1084 = vld [vmem:[#allocation7 + $0x300] sm:$0xff]
        %v1085 = vld [vmem:[#allocation7 + $0x308] sm:$0xff]
        %v1086 = vld [vmem:[#allocation7 + $0x310] sm:$0xff]
        %v1087 = vld [vmem:[#allocation7 + $0x318] sm:$0xff]
        %v1088 = vld [vmem:[#allocation7 + $0x320] sm:$0xff]
        %v1089 = vld [vmem:[#allocation7 + $0x328] sm:$0xff]
        %v1090 = vld [vmem:[#allocation7 + $0x330] sm:$0xff]
        %v1091 = vld [vmem:[#allocation7 + $0x338] sm:$0xff]
        %v1092 = vld [vmem:[#allocation7 + $0x340] sm:$0xff]
        %v1093 = vld [vmem:[#allocation7 + $0x348] sm:$0xff]
        %v1094 = vld [vmem:[#allocation7 + $0x350] sm:$0xff]
        %v1095 = vld [vmem:[#allocation7 + $0x358] sm:$0xff]
        %v1096 = vld [vmem:[#allocation7 + $0x360] sm:$0xff]
        %v1097 = vld [vmem:[#allocation7 + $0x368] sm:$0xff]
        %v1098 = vld [vmem:[#allocation7 + $0x370] sm:$0xff]
        %v1099 = vld [vmem:[#allocation7 + $0x378] sm:$0xff]
        %v1100 = vld [vmem:[#allocation7 + $0x380] sm:$0xff]
        %v1101 = vld [vmem:[#allocation7 + $0x388] sm:$0xff]
        %v1102 = vld [vmem:[#allocation7 + $0x390] sm:$0xff]
        %v1103 = vld [vmem:[#allocation7 + $0x398] sm:$0xff]
        %v1104 = vld [vmem:[#allocation7 + $0x3a0] sm:$0xff]
        %v1105 = vld [vmem:[#allocation7 + $0x3a8] sm:$0xff]
        %v1106 = vld [vmem:[#allocation7 + $0x3b0] sm:$0xff]
        %v1107 = vld [vmem:[#allocation7 + $0x3b8] sm:$0xff]
        %v1108 = vld [vmem:[#allocation7 + $0x3c0] sm:$0xff]
        %v1109 = vld [vmem:[#allocation7 + $0x3c8] sm:$0xff]
        %v1110 = vld [vmem:[#allocation7 + $0x3d0] sm:$0xff]
        %v1111 = vld [vmem:[#allocation7 + $0x3d8] sm:$0xff]
        %v1112 = vld [vmem:[#allocation7 + $0x3e0] sm:$0xff]
        %v1113 = vld [vmem:[#allocation7 + $0x3e8] sm:$0xff]
        %v1114 = vld [vmem:[#allocation7 + $0x3f0] sm:$0xff]
        %v1115 = vld [vmem:[#allocation7 + $0x3f8] sm:$0xff]
        %v1116 = vld [vmem:[#allocation7 + $0x400] sm:$0xff]
        %v1117 = vld [vmem:[#allocation7 + $0x408] sm:$0xff]
        %v1118 = vld [vmem:[#allocation7 + $0x410] sm:$0xff]
        %v1119 = vld [vmem:[#allocation7 + $0x418] sm:$0xff]
        %v1120 = vld [vmem:[#allocation7 + $0x420] sm:$0xff]
        %v1121 = vld [vmem:[#allocation7 + $0x428] sm:$0xff]
        %v1122 = vld [vmem:[#allocation7 + $0x430] sm:$0xff]
        %v1123 = vld [vmem:[#allocation7 + $0x438] sm:$0xff]
        %v1124 = vld [vmem:[#allocation7 + $0x440] sm:$0xff]
        %v1125 = vld [vmem:[#allocation7 + $0x448] sm:$0xff]
        %v1126 = vld [vmem:[#allocation7 + $0x450] sm:$0xff]
        %v1127 = vld [vmem:[#allocation7 + $0x458] sm:$0xff]
        %v1128 = vld [vmem:[#allocation7 + $0x460] sm:$0xff]
        %v1129 = vld [vmem:[#allocation7 + $0x468] sm:$0xff]
        %v1130 = vld [vmem:[#allocation7 + $0x470] sm:$0xff]
        %v1131 = vld [vmem:[#allocation7 + $0x478] sm:$0xff]
        %v1132 = vld [vmem:[#allocation7 + $0x480] sm:$0xff]
        %v1133 = vld [vmem:[#allocation7 + $0x488] sm:$0xff]
        %v1134 = vld [vmem:[#allocation7 + $0x490] sm:$0xff]
        %v1135 = vld [vmem:[#allocation7 + $0x498] sm:$0xff]
        %v1136 = vld [vmem:[#allocation7 + $0x4a0] sm:$0xff]
        %v1137 = vld [vmem:[#allocation7 + $0x4a8] sm:$0xff]
        %v1138 = vld [vmem:[#allocation7 + $0x4b0] sm:$0xff]
        %v1139 = vld [vmem:[#allocation7 + $0x4b8] sm:$0xff]
        %v1140 = vld [vmem:[#allocation7 + $0x4c0] sm:$0xff]
        %v1141 = vld [vmem:[#allocation7 + $0x4c8] sm:$0xff]
        %v1142 = vld [vmem:[#allocation7 + $0x4d0] sm:$0xff]
        %v1143 = vld [vmem:[#allocation7 + $0x4d8] sm:$0xff]
        %v1144 = vld [vmem:[#allocation7 + $0x4e0] sm:$0xff]
        %v1145 = vld [vmem:[#allocation7 + $0x4e8] sm:$0xff]
        %v1146 = vld [vmem:[#allocation7 + $0x4f0] sm:$0xff]
        %v1147 = vld [vmem:[#allocation7 + $0x4f8] sm:$0xff]
        %v1148 = vld [vmem:[#allocation7 + $0x500] sm:$0xff]
        %v1149 = vld [vmem:[#allocation7 + $0x508] sm:$0xff]
        %v1150 = vld [vmem:[#allocation7 + $0x510] sm:$0xff]
        %v1151 = vld [vmem:[#allocation7 + $0x518] sm:$0xff]
        %v1152 = vld [vmem:[#allocation7 + $0x520] sm:$0xff]
        %v1153 = vld [vmem:[#allocation7 + $0x528] sm:$0xff]
        %v1154 = vld [vmem:[#allocation7 + $0x530] sm:$0xff]
        %v1155 = vld [vmem:[#allocation7 + $0x538] sm:$0xff]
        %v1156 = vld [vmem:[#allocation7 + $0x540] sm:$0xff]
        %v1157 = vld [vmem:[#allocation7 + $0x548] sm:$0xff]
        %v1158 = vld [vmem:[#allocation7 + $0x550] sm:$0xff]
        %v1159 = vld [vmem:[#allocation7 + $0x558] sm:$0xff]
        %v1160 = vld [vmem:[#allocation7 + $0x560] sm:$0xff]
        %v1161 = vld [vmem:[#allocation7 + $0x568] sm:$0xff]
        %v1162 = vld [vmem:[#allocation7 + $0x570] sm:$0xff]
        %v1163 = vld [vmem:[#allocation7 + $0x578] sm:$0xff]
        %v1164 = vld [vmem:[#allocation7 + $0x580] sm:$0xff]
        %v1165 = vld [vmem:[#allocation7 + $0x588] sm:$0xff]
        %v1166 = vld [vmem:[#allocation7 + $0x590] sm:$0xff]
        %v1167 = vld [vmem:[#allocation7 + $0x598] sm:$0xff]
        %v1168 = vld [vmem:[#allocation7 + $0x5a0] sm:$0xff]
        %v1169 = vld [vmem:[#allocation7 + $0x5a8] sm:$0xff]
        %v1170 = vld [vmem:[#allocation7 + $0x5b0] sm:$0xff]
        %v1171 = vld [vmem:[#allocation7 + $0x5b8] sm:$0xff]
        %v1172 = vld [vmem:[#allocation7 + $0x5c0] sm:$0xff]
        %v1173 = vld [vmem:[#allocation7 + $0x5c8] sm:$0xff]
        %v1174 = vld [vmem:[#allocation7 + $0x5d0] sm:$0xff]
        %v1175 = vld [vmem:[#allocation7 + $0x5d8] sm:$0xff]
        %v1176 = vld [vmem:[#allocation7 + $0x5e0] sm:$0xff]
        %v1177 = vld [vmem:[#allocation7 + $0x5e8] sm:$0xff]
        %v1178 = vld [vmem:[#allocation7 + $0x5f0] sm:$0xff]
        %v1179 = vld [vmem:[#allocation7 + $0x5f8] sm:$0xff]
        %v1180 = vld [vmem:[#allocation7 + $0x600] sm:$0xff]
        %v1181 = vld [vmem:[#allocation7 + $0x608] sm:$0xff]
        %v1182 = vld [vmem:[#allocation7 + $0x610] sm:$0xff]
        %v1183 = vld [vmem:[#allocation7 + $0x618] sm:$0xff]
        %v1184 = vld [vmem:[#allocation7 + $0x620] sm:$0xff]
        %v1185 = vld [vmem:[#allocation7 + $0x628] sm:$0xff]
        %v1186 = vld [vmem:[#allocation7 + $0x630] sm:$0xff]
        %v1187 = vld [vmem:[#allocation7 + $0x638] sm:$0xff]
        %v1188 = vld [vmem:[#allocation7 + $0x640] sm:$0xff]
        %v1189 = vld [vmem:[#allocation7 + $0x648] sm:$0xff]
        %v1190 = vld [vmem:[#allocation7 + $0x650] sm:$0xff]
        %v1191 = vld [vmem:[#allocation7 + $0x658] sm:$0xff]
        %v1192 = vld [vmem:[#allocation7 + $0x660] sm:$0xff]
        %v1193 = vld [vmem:[#allocation7 + $0x668] sm:$0xff]
        %v1194 = vld [vmem:[#allocation7 + $0x670] sm:$0xff]
        %v1195 = vld [vmem:[#allocation7 + $0x678] sm:$0xff]
        %v1196 = vld [vmem:[#allocation7 + $0x680] sm:$0xff]
        %v1197 = vld [vmem:[#allocation7 + $0x688] sm:$0xff]
        %v1198 = vld [vmem:[#allocation7 + $0x690] sm:$0xff]
        %v1199 = vld [vmem:[#allocation7 + $0x698] sm:$0xff]
        %v1200 = vld [vmem:[#allocation7 + $0x6a0] sm:$0xff]
        %v1201 = vld [vmem:[#allocation7 + $0x6a8] sm:$0xff]
        %v1202 = vld [vmem:[#allocation7 + $0x6b0] sm:$0xff]
        %v1203 = vld [vmem:[#allocation7 + $0x6b8] sm:$0xff]
        %v1204 = vld [vmem:[#allocation7 + $0x6c0] sm:$0xff]
        %v1205 = vld [vmem:[#allocation7 + $0x6c8] sm:$0xff]
        %v1206 = vld [vmem:[#allocation7 + $0x6d0] sm:$0xff]
        %v1207 = vld [vmem:[#allocation7 + $0x6d8] sm:$0xff]
        %v1208 = vld [vmem:[#allocation7 + $0x6e0] sm:$0xff]
        %v1209 = vld [vmem:[#allocation7 + $0x6e8] sm:$0xff]
        %v1210 = vld [vmem:[#allocation7 + $0x6f0] sm:$0xff]
        %v1211 = vld [vmem:[#allocation7 + $0x6f8] sm:$0xff]
        %v1212 = vld [vmem:[#allocation7 + $0x700] sm:$0xff]
        %v1213 = vld [vmem:[#allocation7 + $0x708] sm:$0xff]
        %v1214 = vld [vmem:[#allocation7 + $0x710] sm:$0xff]
        %v1215 = vld [vmem:[#allocation7 + $0x718] sm:$0xff]
        %v1216 = vld [vmem:[#allocation7 + $0x720] sm:$0xff]
        %v1217 = vld [vmem:[#allocation7 + $0x728] sm:$0xff]
        %v1218 = vld [vmem:[#allocation7 + $0x730] sm:$0xff]
        %v1219 = vld [vmem:[#allocation7 + $0x738] sm:$0xff]
        %v1220 = vld [vmem:[#allocation7 + $0x740] sm:$0xff]
        %v1221 = vld [vmem:[#allocation7 + $0x748] sm:$0xff]
        %v1222 = vld [vmem:[#allocation7 + $0x750] sm:$0xff]
        %v1223 = vld [vmem:[#allocation7 + $0x758] sm:$0xff]
        %v1224 = vld [vmem:[#allocation7 + $0x760] sm:$0xff]
        %v1225 = vld [vmem:[#allocation7 + $0x768] sm:$0xff]
        %v1226 = vld [vmem:[#allocation7 + $0x770] sm:$0xff]
        %v1227 = vld [vmem:[#allocation7 + $0x778] sm:$0xff]
        %v1228 = vld [vmem:[#allocation7 + $0x780] sm:$0xff]
        %v1229 = vld [vmem:[#allocation7 + $0x788] sm:$0xff]
        %v1230 = vld [vmem:[#allocation7 + $0x790] sm:$0xff]
        %v1231 = vld [vmem:[#allocation7 + $0x798] sm:$0xff]
        %v1232 = vld [vmem:[#allocation7 + $0x7a0] sm:$0xff]
        %v1233 = vld [vmem:[#allocation7 + $0x7a8] sm:$0xff]
        %v1234 = vld [vmem:[#allocation7 + $0x7b0] sm:$0xff]
        %v1235 = vld [vmem:[#allocation7 + $0x7b8] sm:$0xff]
        %v1236 = vld [vmem:[#allocation7 + $0x7c0] sm:$0xff]
        %v1237 = vld [vmem:[#allocation7 + $0x7c8] sm:$0xff]
        %v1238 = vld [vmem:[#allocation7 + $0x7d0] sm:$0xff]
        %v1239 = vld [vmem:[#allocation7 + $0x7d8] sm:$0xff]
        %v1240 = vld [vmem:[#allocation7 + $0x7e0] sm:$0xff]
        %v1241 = vld [vmem:[#allocation7 + $0x7e8] sm:$0xff]
        %v1242 = vld [vmem:[#allocation7 + $0x7f0] sm:$0xff]
        %v1243 = vld [vmem:[#allocation7 + $0x7f8] sm:$0xff]
        %v1244 = vld [vmem:[%s4] sm:$0x3]
        %v1246 = vperm.slane %v1244, 0
        %v1247 = vperm.slane %v1244, 1
        %1250 = vmatpush.msra.mxu0 %v1018
        %1251 = vmatpush.msra.mxu0 %v1016
        %1252 = vmatpush.msra.mxu0 %v1014
        %1253 = vmatpush.msra.mxu0 %v1012
        %1254 = vmatpush.msra.mxu0 %v1010
        %1255 = vmatpush.msra.mxu0 %v1008
        %1256 = vmatpush.msra.mxu0 %v1006
        %1257 = vmatpush.msra.mxu0 %v1004
        %1258 = vmatpush.msra.mxu0 %v1002
        %1259 = vmatpush.msra.mxu0 %v1000
        %1260 = vmatpush.msra.mxu0 %v998
        %1261 = vmatpush.msra.mxu0 %v996
        %1262 = vmatpush.msra.mxu0 %v994
        %1263 = vmatpush.msra.mxu0 %v992
        %1264 = vmatpush.msra.mxu0 %v990
        %1265 = vmatpush.msra.mxu0 %v988
        %1266 = vmatmul.f32.gmra.mxu0 %v338
        %v1267 = vpop.f32.mrf.mxu0
        %v1268 = vadd.f32 %v1246, %v1267
        %1269 = vmatmul.f32.gmra.mxu0 %v346
        %v1270 = vpop.f32.mrf.mxu0
        %v1271 = vadd.f32 %v1246, %v1270
        %1272 = vdwg.mxu0
        %1273 = vmatpush.msra.mxu0 %v1050
        %1274 = vmatpush.msra.mxu0 %v1048
        %1275 = vmatpush.msra.mxu0 %v1046
        %1276 = vmatpush.msra.mxu0 %v1044
        %1277 = vmatpush.msra.mxu0 %v1042
        %1278 = vmatpush.msra.mxu0 %v1040
        %1279 = vmatpush.msra.mxu0 %v1038
        %1280 = vmatpush.msra.mxu0 %v1036
        %1281 = vmatpush.msra.mxu0 %v1034
        %1282 = vmatpush.msra.mxu0 %v1032
        %1283 = vmatpush.msra.mxu0 %v1030
        %1284 = vmatpush.msra.mxu0 %v1028
        %1285 = vmatpush.msra.mxu0 %v1026
        %1286 = vmatpush.msra.mxu0 %v1024
        %1287 = vmatpush.msra.mxu0 %v1022
        %1288 = vmatpush.msra.mxu0 %v1020
        %1289 = vmatmul.f32.gmra.mxu0 %v339
        %v1290 = vpop.f32.mrf.mxu0
        %v1291 = vadd.f32 %v1268, %v1290
        %1292 = vmatmul.f32.gmra.mxu0 %v347
        %v1293 = vpop.f32.mrf.mxu0
        %v1294 = vadd.f32 %v1271, %v1293
        %1295 = vdwg.mxu0
        %1296 = vmatpush.msra.mxu0 %v1082
        %1297 = vmatpush.msra.mxu0 %v1080
        %1298 = vmatpush.msra.mxu0 %v1078
        %1299 = vmatpush.msra.mxu0 %v1076
        %1300 = vmatpush.msra.mxu0 %v1074
        %1301 = vmatpush.msra.mxu0 %v1072
        %1302 = vmatpush.msra.mxu0 %v1070
        %1303 = vmatpush.msra.mxu0 %v1068
        %1304 = vmatpush.msra.mxu0 %v1066
        %1305 = vmatpush.msra.mxu0 %v1064
        %1306 = vmatpush.msra.mxu0 %v1062
        %1307 = vmatpush.msra.mxu0 %v1060
        %1308 = vmatpush.msra.mxu0 %v1058
        %1309 = vmatpush.msra.mxu0 %v1056
        %1310 = vmatpush.msra.mxu0 %v1054
        %1311 = vmatpush.msra.mxu0 %v1052
        %1312 = vmatmul.f32.gmra.mxu0 %v340
        %v1313 = vpop.f32.mrf.mxu0
        %v1314 = vadd.f32 %v1291, %v1313
        %1315 = vmatmul.f32.gmra.mxu0 %v348
        %v1316 = vpop.f32.mrf.mxu0
        %v1317 = vadd.f32 %v1294, %v1316
        %1318 = vdwg.mxu0
        %1319 = vmatpush.msra.mxu0 %v1114
        %1320 = vmatpush.msra.mxu0 %v1112
        %1321 = vmatpush.msra.mxu0 %v1110
        %1322 = vmatpush.msra.mxu0 %v1108
        %1323 = vmatpush.msra.mxu0 %v1106
        %1324 = vmatpush.msra.mxu0 %v1104
        %1325 = vmatpush.msra.mxu0 %v1102
        %1326 = vmatpush.msra.mxu0 %v1100
        %1327 = vmatpush.msra.mxu0 %v1098
        %1328 = vmatpush.msra.mxu0 %v1096
        %1329 = vmatpush.msra.mxu0 %v1094
        %1330 = vmatpush.msra.mxu0 %v1092
        %1331 = vmatpush.msra.mxu0 %v1090
        %1332 = vmatpush.msra.mxu0 %v1088
        %1333 = vmatpush.msra.mxu0 %v1086
        %1334 = vmatpush.msra.mxu0 %v1084
        %1335 = vmatmul.f32.gmra.mxu0 %v341
        %v1336 = vpop.f32.mrf.mxu0
        %v1337 = vadd.f32 %v1314, %v1336
        %1338 = vmatmul.f32.gmra.mxu0 %v349
        %v1339 = vpop.f32.mrf.mxu0
        %v1340 = vadd.f32 %v1317, %v1339
        %1341 = vdwg.mxu0
        %1342 = vmatpush.msra.mxu0 %v1146
        %1343 = vmatpush.msra.mxu0 %v1144
        %1344 = vmatpush.msra.mxu0 %v1142
        %1345 = vmatpush.msra.mxu0 %v1140
        %1346 = vmatpush.msra.mxu0 %v1138
        %1347 = vmatpush.msra.mxu0 %v1136
        %1348 = vmatpush.msra.mxu0 %v1134
        %1349 = vmatpush.msra.mxu0 %v1132
        %1350 = vmatpush.msra.mxu0 %v1130
        %1351 = vmatpush.msra.mxu0 %v1128
        %1352 = vmatpush.msra.mxu0 %v1126
        %1353 = vmatpush.msra.mxu0 %v1124
        %1354 = vmatpush.msra.mxu0 %v1122
        %1355 = vmatpush.msra.mxu0 %v1120
        %1356 = vmatpush.msra.mxu0 %v1118
        %1357 = vmatpush.msra.mxu0 %v1116
        %1358 = vmatmul.f32.gmra.mxu0 %v342
        %v1359 = vpop.f32.mrf.mxu0
        %v1360 = vadd.f32 %v1337, %v1359
        %1361 = vmatmul.f32.gmra.mxu0 %v350
        %v1362 = vpop.f32.mrf.mxu0
        %v1363 = vadd.f32 %v1340, %v1362
        %1364 = vdwg.mxu0
        %1365 = vmatpush.msra.mxu0 %v1178
        %1366 = vmatpush.msra.mxu0 %v1176
        %1367 = vmatpush.msra.mxu0 %v1174
        %1368 = vmatpush.msra.mxu0 %v1172
        %1369 = vmatpush.msra.mxu0 %v1170
        %1370 = vmatpush.msra.mxu0 %v1168
        %1371 = vmatpush.msra.mxu0 %v1166
        %1372 = vmatpush.msra.mxu0 %v1164
        %1373 = vmatpush.msra.mxu0 %v1162
        %1374 = vmatpush.msra.mxu0 %v1160
        %1375 = vmatpush.msra.mxu0 %v1158
        %1376 = vmatpush.msra.mxu0 %v1156
        %1377 = vmatpush.msra.mxu0 %v1154
        %1378 = vmatpush.msra.mxu0 %v1152
        %1379 = vmatpush.msra.mxu0 %v1150
        %1380 = vmatpush.msra.mxu0 %v1148
        %1381 = vmatmul.f32.gmra.mxu0 %v343
        %v1382 = vpop.f32.mrf.mxu0
        %v1383 = vadd.f32 %v1360, %v1382
        %1384 = vmatmul.f32.gmra.mxu0 %v351
        %v1385 = vpop.f32.mrf.mxu0
        %v1386 = vadd.f32 %v1363, %v1385
        %1387 = vdwg.mxu0
        %1388 = vmatpush.msra.mxu0 %v1210
        %1389 = vmatpush.msra.mxu0 %v1208
        %1390 = vmatpush.msra.mxu0 %v1206
        %1391 = vmatpush.msra.mxu0 %v1204
        %1392 = vmatpush.msra.mxu0 %v1202
        %1393 = vmatpush.msra.mxu0 %v1200
        %1394 = vmatpush.msra.mxu0 %v1198
        %1395 = vmatpush.msra.mxu0 %v1196
        %1396 = vmatpush.msra.mxu0 %v1194
        %1397 = vmatpush.msra.mxu0 %v1192
        %1398 = vmatpush.msra.mxu0 %v1190
        %1399 = vmatpush.msra.mxu0 %v1188
        %1400 = vmatpush.msra.mxu0 %v1186
        %1401 = vmatpush.msra.mxu0 %v1184
        %1402 = vmatpush.msra.mxu0 %v1182
        %1403 = vmatpush.msra.mxu0 %v1180
        %1404 = vmatmul.f32.gmra.mxu0 %v344
        %v1405 = vpop.f32.mrf.mxu0
        %v1406 = vadd.f32 %v1383, %v1405
        %1407 = vmatmul.f32.gmra.mxu0 %v352
        %v1408 = vpop.f32.mrf.mxu0
        %v1409 = vadd.f32 %v1386, %v1408
        %1410 = vdwg.mxu0
        %1411 = vmatpush.msra.mxu0 %v1242
        %1412 = vmatpush.msra.mxu0 %v1240
        %1413 = vmatpush.msra.mxu0 %v1238
        %1414 = vmatpush.msra.mxu0 %v1236
        %1415 = vmatpush.msra.mxu0 %v1234
        %1416 = vmatpush.msra.mxu0 %v1232
        %1417 = vmatpush.msra.mxu0 %v1230
        %1418 = vmatpush.msra.mxu0 %v1228
        %1419 = vmatpush.msra.mxu0 %v1226
        %1420 = vmatpush.msra.mxu0 %v1224
        %1421 = vmatpush.msra.mxu0 %v1222
        %1422 = vmatpush.msra.mxu0 %v1220
        %1423 = vmatpush.msra.mxu0 %v1218
        %1424 = vmatpush.msra.mxu0 %v1216
        %1425 = vmatpush.msra.mxu0 %v1214
        %1426 = vmatpush.msra.mxu0 %v1212
        %1427 = vmatmul.f32.gmra.mxu0 %v345
        %v1428 = vpop.f32.mrf.mxu0
        %v1429 = vadd.f32 %v1406, %v1428
        %1430 = vmatmul.f32.gmra.mxu0 %v353
        %v1431 = vpop.f32.mrf.mxu0
        %v1432 = vadd.f32 %v1409, %v1431
        %1433 = vdwg.mxu0
        %1434 = vmatpush.msra.mxu0 %v1019
        %1435 = vmatpush.msra.mxu0 %v1017
        %1436 = vmatpush.msra.mxu0 %v1015
        %1437 = vmatpush.msra.mxu0 %v1013
        %1438 = vmatpush.msra.mxu0 %v1011
        %1439 = vmatpush.msra.mxu0 %v1009
        %1440 = vmatpush.msra.mxu0 %v1007
        %1441 = vmatpush.msra.mxu0 %v1005
        %1442 = vmatpush.msra.mxu0 %v1003
        %1443 = vmatpush.msra.mxu0 %v1001
        %1444 = vmatpush.msra.mxu0 %v999
        %1445 = vmatpush.msra.mxu0 %v997
        %1446 = vmatpush.msra.mxu0 %v995
        %1447 = vmatpush.msra.mxu0 %v993
        %1448 = vmatpush.msra.mxu0 %v991
        %1449 = vmatpush.msra.mxu0 %v989
        %1450 = vmatmul.f32.gmra.mxu0 %v338
        %v1451 = vpop.f32.mrf.mxu0
        %v1452 = vadd.f32 %v1247, %v1451
        %1453 = vmatmul.f32.gmra.mxu0 %v346
        %v1454 = vpop.f32.mrf.mxu0
        %v1455 = vadd.f32 %v1247, %v1454
        %1456 = vdwg.mxu0
        %1457 = vmatpush.msra.mxu0 %v1051
        %1458 = vmatpush.msra.mxu0 %v1049
        %1459 = vmatpush.msra.mxu0 %v1047
        %1460 = vmatpush.msra.mxu0 %v1045
        %1461 = vmatpush.msra.mxu0 %v1043
        %1462 = vmatpush.msra.mxu0 %v1041
        %1463 = vmatpush.msra.mxu0 %v1039
        %1464 = vmatpush.msra.mxu0 %v1037
        %1465 = vmatpush.msra.mxu0 %v1035
        %1466 = vmatpush.msra.mxu0 %v1033
        %1467 = vmatpush.msra.mxu0 %v1031
        %1468 = vmatpush.msra.mxu0 %v1029
        %1469 = vmatpush.msra.mxu0 %v1027
        %1470 = vmatpush.msra.mxu0 %v1025
        %1471 = vmatpush.msra.mxu0 %v1023
        %1472 = vmatpush.msra.mxu0 %v1021
        %1473 = vmatmul.f32.gmra.mxu0 %v339
        %v1474 = vpop.f32.mrf.mxu0
        %v1475 = vadd.f32 %v1452, %v1474
        %1476 = vmatmul.f32.gmra.mxu0 %v347
        %v1477 = vpop.f32.mrf.mxu0
        %v1478 = vadd.f32 %v1455, %v1477
        %1479 = vdwg.mxu0
        %1480 = vmatpush.msra.mxu0 %v1083
        %1481 = vmatpush.msra.mxu0 %v1081
        %1482 = vmatpush.msra.mxu0 %v1079
        %1483 = vmatpush.msra.mxu0 %v1077
        %1484 = vmatpush.msra.mxu0 %v1075
        %1485 = vmatpush.msra.mxu0 %v1073
        %1486 = vmatpush.msra.mxu0 %v1071
        %1487 = vmatpush.msra.mxu0 %v1069
        %1488 = vmatpush.msra.mxu0 %v1067
        %1489 = vmatpush.msra.mxu0 %v1065
        %1490 = vmatpush.msra.mxu0 %v1063
        %1491 = vmatpush.msra.mxu0 %v1061
        %1492 = vmatpush.msra.mxu0 %v1059
        %1493 = vmatpush.msra.mxu0 %v1057
        %1494 = vmatpush.msra.mxu0 %v1055
        %1495 = vmatpush.msra.mxu0 %v1053
        %1496 = vmatmul.f32.gmra.mxu0 %v340
        %v1497 = vpop.f32.mrf.mxu0
        %v1498 = vadd.f32 %v1475, %v1497
        %1499 = vmatmul.f32.gmra.mxu0 %v348
        %v1500 = vpop.f32.mrf.mxu0
        %v1501 = vadd.f32 %v1478, %v1500
        %1502 = vdwg.mxu0
        %1503 = vmatpush.msra.mxu0 %v1115
        %1504 = vmatpush.msra.mxu0 %v1113
        %1505 = vmatpush.msra.mxu0 %v1111
        %1506 = vmatpush.msra.mxu0 %v1109
        %1507 = vmatpush.msra.mxu0 %v1107
        %1508 = vmatpush.msra.mxu0 %v1105
        %1509 = vmatpush.msra.mxu0 %v1103
        %1510 = vmatpush.msra.mxu0 %v1101
        %1511 = vmatpush.msra.mxu0 %v1099
        %1512 = vmatpush.msra.mxu0 %v1097
        %1513 = vmatpush.msra.mxu0 %v1095
        %1514 = vmatpush.msra.mxu0 %v1093
        %1515 = vmatpush.msra.mxu0 %v1091
        %1516 = vmatpush.msra.mxu0 %v1089
        %1517 = vmatpush.msra.mxu0 %v1087
        %1518 = vmatpush.msra.mxu0 %v1085
        %1519 = vmatmul.f32.gmra.mxu0 %v341
        %v1520 = vpop.f32.mrf.mxu0
        %v1521 = vadd.f32 %v1498, %v1520
        %1522 = vmatmul.f32.gmra.mxu0 %v349
        %v1523 = vpop.f32.mrf.mxu0
        %v1524 = vadd.f32 %v1501, %v1523
        %1525 = vdwg.mxu0
        %1526 = vmatpush.msra.mxu0 %v1147
        %1527 = vmatpush.msra.mxu0 %v1145
        %1528 = vmatpush.msra.mxu0 %v1143
        %1529 = vmatpush.msra.mxu0 %v1141
        %1530 = vmatpush.msra.mxu0 %v1139
        %1531 = vmatpush.msra.mxu0 %v1137
        %1532 = vmatpush.msra.mxu0 %v1135
        %1533 = vmatpush.msra.mxu0 %v1133
        %1534 = vmatpush.msra.mxu0 %v1131
        %1535 = vmatpush.msra.mxu0 %v1129
        %1536 = vmatpush.msra.mxu0 %v1127
        %1537 = vmatpush.msra.mxu0 %v1125
        %1538 = vmatpush.msra.mxu0 %v1123
        %1539 = vmatpush.msra.mxu0 %v1121
        %1540 = vmatpush.msra.mxu0 %v1119
        %1541 = vmatpush.msra.mxu0 %v1117
        %1542 = vmatmul.f32.gmra.mxu0 %v342
        %v1543 = vpop.f32.mrf.mxu0
        %v1544 = vadd.f32 %v1521, %v1543
        %1545 = vmatmul.f32.gmra.mxu0 %v350
        %v1546 = vpop.f32.mrf.mxu0
        %v1547 = vadd.f32 %v1524, %v1546
        %1548 = vdwg.mxu0
        %1549 = vmatpush.msra.mxu0 %v1179
        %1550 = vmatpush.msra.mxu0 %v1177
        %1551 = vmatpush.msra.mxu0 %v1175
        %1552 = vmatpush.msra.mxu0 %v1173
        %1553 = vmatpush.msra.mxu0 %v1171
        %1554 = vmatpush.msra.mxu0 %v1169
        %1555 = vmatpush.msra.mxu0 %v1167
        %1556 = vmatpush.msra.mxu0 %v1165
        %1557 = vmatpush.msra.mxu0 %v1163
        %1558 = vmatpush.msra.mxu0 %v1161
        %1559 = vmatpush.msra.mxu0 %v1159
        %1560 = vmatpush.msra.mxu0 %v1157
        %1561 = vmatpush.msra.mxu0 %v1155
        %1562 = vmatpush.msra.mxu0 %v1153
        %1563 = vmatpush.msra.mxu0 %v1151
        %1564 = vmatpush.msra.mxu0 %v1149
        %1565 = vmatmul.f32.gmra.mxu0 %v343
        %v1566 = vpop.f32.mrf.mxu0
        %v1567 = vadd.f32 %v1544, %v1566
        %1568 = vmatmul.f32.gmra.mxu0 %v351
        %v1569 = vpop.f32.mrf.mxu0
        %v1570 = vadd.f32 %v1547, %v1569
        %1571 = vdwg.mxu0
        %1572 = vmatpush.msra.mxu0 %v1211
        %1573 = vmatpush.msra.mxu0 %v1209
        %1574 = vmatpush.msra.mxu0 %v1207
        %1575 = vmatpush.msra.mxu0 %v1205
        %1576 = vmatpush.msra.mxu0 %v1203
        %1577 = vmatpush.msra.mxu0 %v1201
        %1578 = vmatpush.msra.mxu0 %v1199
        %1579 = vmatpush.msra.mxu0 %v1197
        %1580 = vmatpush.msra.mxu0 %v1195
        %1581 = vmatpush.msra.mxu0 %v1193
        %1582 = vmatpush.msra.mxu0 %v1191
        %1583 = vmatpush.msra.mxu0 %v1189
        %1584 = vmatpush.msra.mxu0 %v1187
        %1585 = vmatpush.msra.mxu0 %v1185
        %1586 = vmatpush.msra.mxu0 %v1183
        %1587 = vmatpush.msra.mxu0 %v1181
        %1588 = vmatmul.f32.gmra.mxu0 %v344
        %v1589 = vpop.f32.mrf.mxu0
        %v1590 = vadd.f32 %v1567, %v1589
        %1591 = vmatmul.f32.gmra.mxu0 %v352
        %v1592 = vpop.f32.mrf.mxu0
        %v1593 = vadd.f32 %v1570, %v1592
        %1594 = vdwg.mxu0
        %1595 = vmatpush.msra.mxu0 %v1243
        %1596 = vmatpush.msra.mxu0 %v1241
        %1597 = vmatpush.msra.mxu0 %v1239
        %1598 = vmatpush.msra.mxu0 %v1237
        %1599 = vmatpush.msra.mxu0 %v1235
        %1600 = vmatpush.msra.mxu0 %v1233
        %1601 = vmatpush.msra.mxu0 %v1231
        %1602 = vmatpush.msra.mxu0 %v1229
        %1603 = vmatpush.msra.mxu0 %v1227
        %1604 = vmatpush.msra.mxu0 %v1225
        %1605 = vmatpush.msra.mxu0 %v1223
        %1606 = vmatpush.msra.mxu0 %v1221
        %1607 = vmatpush.msra.mxu0 %v1219
        %1608 = vmatpush.msra.mxu0 %v1217
        %1609 = vmatpush.msra.mxu0 %v1215
        %1610 = vmatpush.msra.mxu0 %v1213
        %1611 = vmatmul.f32.gmra.mxu0 %v345
        %v1612 = vpop.f32.mrf.mxu0
        %v1613 = vadd.f32 %v1590, %v1612
        %1614 = vmatmul.f32.gmra.mxu0 %v353
        %v1615 = vpop.f32.mrf.mxu0
        %v1616 = vadd.f32 %v1593, %v1615
        %1617 = vdwg.mxu0
        %v1618 = vxor.u32 %v1429, 2147483648
        %v1619 = vxor.u32 %v1613, 2147483648
        %v1620 = vxor.u32 %v1432, 2147483648
        %v1621 = vxor.u32 %v1616, 2147483648
        %v1622 = vmul.f32 %v1618, 1.442695
        %v1623 = vpow.pop %v1622
        %v1624 = vmul.f32 %v1619, 1.442695
        %v1625 = vpow.pop %v1624
        %v1626 = vmul.f32 %v1620, 1.442695
        %v1627 = vpow.pop %v1626
        %v1628 = vmul.f32 %v1621, 1.442695
        %v1629 = vpow.pop %v1628
        %v1630 = vadd.f32 %v1623, 1.0
        %v1631 = vadd.f32 %v1625, 1.0
        %v1632 = vadd.f32 %v1627, 1.0
        %v1633 = vadd.f32 %v1629, 1.0
        %v1634 = vrcp.pop %v1630
        %v1635 = vmul.f32 %v1630, %v1634
        %v1636 = vsub.f32 1.0, %v1635
        %v1637 = vmul.f32 %v1634, %v1636
        %v1638 = vadd.f32 %v1634, %v1637
        %vm1639 = vweird.f32 %v1630
        %vm1640 = vweird.f32 %v1634
        %vm1641 = vmor %vm1639, %vm1640
        %v1642 = vsel %vm1641, %v1634, %v1638
        %v1643 = vand.u32 2147483647, %v1630
        %vm1644 = vcmp.eq.f32.partialorder %v1643, 8.507059e+37
        %v1645 = vand.u32 %v1630, 2147483648
        %v1646 = vor.u32 1.1754944e-38, %v1645
        %v1647 = vsel %vm1644, %v1646, %v1642
        %v1648 = vmul.f32 1.0, %v1647
        %v1649 = vrcp.pop %v1631
        %v1650 = vmul.f32 %v1631, %v1649
        %v1651 = vsub.f32 1.0, %v1650
        %v1652 = vmul.f32 %v1649, %v1651
        %v1653 = vadd.f32 %v1649, %v1652
        %vm1654 = vweird.f32 %v1631
        %vm1655 = vweird.f32 %v1649
        %vm1656 = vmor %vm1654, %vm1655
        %v1657 = vsel %vm1656, %v1649, %v1653
        %v1658 = vand.u32 2147483647, %v1631
        %vm1659 = vcmp.eq.f32.partialorder %v1658, 8.507059e+37
        %v1660 = vand.u32 %v1631, 2147483648
        %v1661 = vor.u32 1.1754944e-38, %v1660
        %v1662 = vsel %vm1659, %v1661, %v1657
        %v1663 = vmul.f32 1.0, %v1662
        %v1664 = vrcp.pop %v1632
        %v1665 = vmul.f32 %v1632, %v1664
        %v1666 = vsub.f32 1.0, %v1665
        %v1667 = vmul.f32 %v1664, %v1666
        %v1668 = vadd.f32 %v1664, %v1667
        %vm1669 = vweird.f32 %v1632
        %vm1670 = vweird.f32 %v1664
        %vm1671 = vmor %vm1669, %vm1670
        %v1672 = vsel %vm1671, %v1664, %v1668
        %v1673 = vand.u32 2147483647, %v1632
        %vm1674 = vcmp.eq.f32.partialorder %v1673, 8.507059e+37
        %v1675 = vand.u32 %v1632, 2147483648
        %v1676 = vor.u32 1.1754944e-38, %v1675
        %v1677 = vsel %vm1674, %v1676, %v1672
        %v1678 = vmul.f32 1.0, %v1677
        %v1679 = vrcp.pop %v1633
        %v1680 = vmul.f32 %v1633, %v1679
        %v1681 = vsub.f32 1.0, %v1680
        %v1682 = vmul.f32 %v1679, %v1681
        %v1683 = vadd.f32 %v1679, %v1682
        %vm1684 = vweird.f32 %v1633
        %vm1685 = vweird.f32 %v1679
        %vm1686 = vmor %vm1684, %vm1685
        %v1687 = vsel %vm1686, %v1679, %v1683
        %v1688 = vand.u32 2147483647, %v1633
        %vm1689 = vcmp.eq.f32.partialorder %v1688, 8.507059e+37
        %v1690 = vand.u32 %v1633, 2147483648
        %v1691 = vor.u32 1.1754944e-38, %v1690
        %v1692 = vsel %vm1689, %v1691, %v1687
        %v1693 = vmul.f32 1.0, %v1692
        %v1694 = vmul.f32 %v984, %v1648
        %v1695 = vmul.f32 %v985, %v1663
        %v1696 = vmul.f32 %v986, %v1678
        %v1697 = vmul.f32 %v987, %v1693
        %v1698 = vld [vmem:[%s5] sm:$0x3]
        %v1700 = vperm.slane %v1698, 0
        %v1701 = vperm.slane %v1698, 1
        %v1704 = vmul.f32 %v1694, %v1700
        %v1705 = vmul.f32 %v1695, %v1701
        %v1706 = vmul.f32 %v1696, %v1700
        %v1707 = vmul.f32 %v1697, %v1701
        %v1708 = vadd.f32 %v1704, %v1705
        %1709 = vadd.xlane.f32.xlu0 %v1708
        %v1710 = vpop.xlane.xlu0 %1709
        %v1711 = vadd.f32 %v1706, %v1707
        %1712 = vadd.xlane.f32.xlu0 %v1711
        %v1713 = vpop.xlane.xlu0 %1712
        %s1714 = sld [smem:[#allocation2]]
        %v1715 = vstv %s1714
        %v1716 = vadd.f32 %v1710, %v1715
        %v1717 = vadd.f32 %v1713, %v1715
        %vm1718 = vcmask 7168
        %1719 = vst.msk [vmem:[%s336] sm:$0xff] %vm1718, %v1716
        %1720 = vst.msk [vmem:[%s336 + $0x8] sm:$0xff] %vm1718, %v1717
        %s1721 = smul.u32 2, %s23
        %p1722 = scmp.lt.s32.totalorder %s1721, 5
        %s1723 = scalar_select %p1722, %s1721, 5
        %s1724 = smul.addr %s1723, 8
        %s1725 = scalar_lea.vmem %s7, %s1724
        // Predicated region
        $region61: #{tpu_custom_call.1} parent=47 // pred_check
          %p1726 = pneg %p193
        $region62: #{tpu_custom_call.1} parent=47 // pred_check_branch
          %1728 = sbr.rel (%p1726) target = $region64
        $region63: #{tpu_custom_call.1} parent=47 // pred_region
          %s1729 = smul.u32 2, %s23
        $region64: #{tpu_custom_call.1} parent=47 // pred_fallthru
          _
      $region48: #{tpu_custom_call.1} parent=5 // pred_fallthru
        _
      %p1730 = scmp.le.s32.totalorder 2, %s18
      // Predicated region
      $region65: #{tpu_custom_call.1} parent=5 // pred_check
        %p1731 = pneg %p1730
      $region66: #{tpu_custom_call.1} parent=5 // pred_check_branch
        %1733 = sbr.rel (%p1731) target = $region68
      $region67: #{tpu_custom_call.1} parent=5 // pred_region
        %s1734 = ssub.s32 %s18, 2
        // Predicated region
        $region69: #{tpu_custom_call.1} parent=67 // pred_check
          %p1735 = pneg %p199
        $region70: #{tpu_custom_call.1} parent=67 // pred_check_branch
          %1737 = sbr.rel (%p1735) target = $region72
        $region71: #{tpu_custom_call.1} parent=67 // pred_region
          %s1738 = smul.u32 2, %s24
          %p1739 = scmp.lt.s32.totalorder %s1738, 5
          %s1740 = scalar_select %p1739, %s1738, 5
          %s1741 = smul.addr %s1740, 8
          %s1742 = scalar_lea.vmem %s7, %s1741
        $region72: #{tpu_custom_call.1} parent=67 // pred_fallthru
          _
      $region68: #{tpu_custom_call.1} parent=5 // pred_fallthru
        _
    $region6: #{tpu_custom_call.1} parent=1 // loop_footer
      %s22 = sadd.s32 1, %s18
    $region7: #{tpu_custom_call.1} parent=1 // loop_footer_branch
      %17 = sbr.rel target = $region3
    $region8: #{tpu_custom_call.1} parent=1 // loop_exit
      _
    %1743 = vsyncpa [#allocation4], 1
    %s1744 = scalar_lea.sflag [#allocation4], 1
    %1745 = vsyncpa %s1744, 1
    %1746 = vsyncpa [#allocation6], 1

</llo_original>
